<compile_context>
chip_gen: v7x
topology: tpu7x:2x2x1
jax: 0.10.0
libtpu: 0.0.40
codegen_flags: <defaults>
</compile_context>

<pallas_src>
import math

import jax
import jax.numpy as jnp
from jax.experimental import pallas as pl
from jax.experimental.pallas import tpu as pltpu


def _round_up(n, m):
    return ((n + m - 1) // m) * m


# ---------------------------------------------------------------------------
# Fused Pallas kernel (whole TCN, one grid step per batch element)
# ---------------------------------------------------------------------------
def _make_fused_tcn_kernel(meta, Lp, K, pad_lanes, cmax, cdt):
    """meta: per-layer dict(cin8, cout8, dilation, has_ds)."""
    n_layers = len(meta)

    def kernel(*refs):
        # Unpack: (x, per-layer weights..., out, x_slab, h_slab)
        pos = 0
        x_ref = refs[pos]; pos += 1
        layer_refs = []
        for m in meta:
            n = 6 if m["has_ds"] else 4
            layer_refs.append(refs[pos:pos + n]); pos += n
        out_ref = refs[pos]; pos += 1
        x_slab, h_slab = refs[pos], refs[pos + 1]

        # Zero ONLY the causal halo lanes (one (cmax, pad_lanes) tile per slab).
        # Padded channel rows need no zeroing: the wrapper zero-pads the input
        # channels and all padded weight rows / bias entries are zero, so zeros
        # propagate through every layer.
        if pad_lanes > 0:
            x_slab[:, :pad_lanes] = jnp.zeros((cmax, pad_lanes), cdt)
            h_slab[:, :pad_lanes] = jnp.zeros((cmax, pad_lanes), cdt)

        # Stage this batch element's (channel/time pre-padded) input.
        cin0 = meta[0]["cin8"]
        x_slab[:cin0, pad_lanes:] = x_ref[0].astype(cdt)

        for li, m in enumerate(meta):
            w1, b1, w2, b2 = layer_refs[li][:4]
            d = m["dilation"]
            cin8, cout8 = m["cin8"], m["cout8"]

            # Lane-aligned view of this layer's input (also the identity residual
            # and the k = K-1 conv tap).
            xin = x_slab[:cin8, pad_lanes:pad_lanes + Lp]

            # ---- conv1 + bias + ReLU: K accumulating MXU dots (no im2col) ----
            h1 = b1[...]                                  # (cout8, 1) f32, broadcast
            for k in range(K):
                off = pad_lanes - (K - 1 - k) * d         # static, >= 0
                xk = xin if k == K - 1 else x_slab[:cin8, off:off + Lp]
                h1 = h1 + jnp.dot(w1[k], xk, preferred_element_type=jnp.float32)
            h1 = jnp.maximum(h1, 0.0)
            # ReLU(conv1) written straight into the haloed h slab (no extra copy).
            h_slab[:cout8, pad_lanes:] = h1.astype(cdt)

            # ---- conv2 + bias + ReLU ----
            h2 = b2[...]
            for k in range(K):
                off = pad_lanes - (K - 1 - k) * d
                h2 = h2 + jnp.dot(w2[k], h_slab[:cout8, off:off + Lp],
                                  preferred_element_type=jnp.float32)
            h2 = jnp.maximum(h2, 0.0)

            # ---- residual (identity or 1x1-conv downsample) + ReLU ----
            if m["has_ds"]:
                wd, bd = layer_refs[li][4], layer_refs[li][5]
                res = jnp.dot(wd[...], xin, preferred_element_type=jnp.float32) + bd[...]
            else:
                res = xin.astype(jnp.float32)
            y = jnp.maximum(h2 + res, 0.0)

            if li == n_layers - 1:
                out_ref[0] = y.astype(out_ref.dtype)       # lane-dense, unmasked vst
            else:
                x_slab[:cout8, pad_lanes:] = y.astype(cdt)  # next layer's input

    return kernel


# ---------------------------------------------------------------------------
# Wrapper: one pallas_call for the whole TCN
# ---------------------------------------------------------------------------
def tcn_forward(packed, x_ncl, kernel_size):
    """Fused TCN forward.  x_ncl: (B, C, L) in PyTorch NCL layout."""
    B, C0, L = x_ncl.shape
    K = kernel_size
    cdt = packed[0]["cdt"]

    Lp = _round_up(max(L, 128), 128)                    # lane-dense time
    max_pad = max((K - 1) * p["dilation"] for p in packed)
    pad_lanes = _round_up(max_pad, 128) if max_pad > 0 else 0   # lane-aligned halo
    cmax = max(max(p["cin8"], p["cout8"]) for p in packed)
    cin8_0 = packed[0]["cin8"]
    cout8_last = packed[-1]["cout8"]
    cout_last = packed[-1]["cout"]

    # Pad channels to the sublane multiple and time to a 128-lane multiple once
    # at the boundary (causality => right-padding never affects valid outputs).
    xp = jnp.zeros((B, cin8_0, Lp), cdt).at[:, :C0, :L].set(x_ncl.astype(cdt))

    inputs = [xp]
    in_specs = [pl.BlockSpec((1, cin8_0, Lp), lambda b: (b, 0, 0))]
    meta = []
    for p in packed:
        meta.append(dict(cin8=p["cin8"], cout8=p["cout8"],
                         dilation=p["dilation"], has_ds=p["wdp"] is not None))
        arrs = [p["w1p"], p["b1c"], p["w2p"], p["b2c"]]
        if p["wdp"] is not None:
            arrs += [p["wdp"], p["bdc"]]
        for a in arrs:
            inputs.append(a)
            zero_idx = (0,) * a.ndim
            in_specs.append(pl.BlockSpec(a.shape, lambda b, _z=zero_idx: _z))

    # Exactly two reusable slabs for the whole network (no per-layer scratch).
    scratch_shapes = [
        pltpu.VMEM((cmax, pad_lanes + Lp), cdt),    # x slab: layer input / y (+ halo)
        pltpu.VMEM((cmax, pad_lanes + Lp), cdt),    # h slab: ReLU(conv1)     (+ halo)
    ]

    # VMEM budget sized from actual usage (scratch + double-buffered blocks).
    itemsize = jnp.dtype(cdt).itemsize
    slab_bytes = 2 * cmax * (pad_lanes + Lp) * itemsize
    io_bytes = (cin8_0 * Lp) * itemsize + (cout8_last * Lp) * jnp.dtype(x_ncl.dtype).itemsize
    w_bytes = sum(int(a.size) * a.dtype.itemsize for a in inputs[1:])
    needed = slab_bytes + 2 * (io_bytes + w_bytes)
    vmem_limit = int(min(max(2 * needed, 32 * 2**20), 100 * 2**20))

    kernel = _make_fused_tcn_kernel(meta, Lp, K, pad_lanes, cmax, cdt)
    # TODO(synk): for long sequences, add a second (parallel) grid axis over
    # 256-512-lane time tiles with a cumulative-receptive-field halo so VMEM
    # stays bounded on v7x (64 MiB) and both of its TensorCores get many steps.
    out = pl.pallas_call(
        kernel,
        out_shape=jax.ShapeDtypeStruct((B, cout8_last, Lp), x_ncl.dtype),
        grid=(B,),
        in_specs=in_specs,
        out_specs=pl.BlockSpec((1, cout8_last, Lp), lambda b: (b, 0, 0)),
        scratch_shapes=scratch_shapes,
        compiler_params=pltpu.CompilerParams(
            dimension_semantics=("parallel",),
            vmem_limit_bytes=vmem_limit),
    )(*inputs)
    return out[:, :cout_last, :L]


# ---------------------------------------------------------------------------
# Parameter handling (weight_norm resolution + kernel-friendly packing, hoisted)
# ---------------------------------------------------------------------------
def weight_norm_effective(v, g):
    # PyTorch weight_norm(dim=0): w = g * v / ||v||, norm over (in, k) per out-chan
    norm = jnp.sqrt(jnp.sum(v * v, axis=(1, 2), keepdims=True))
    return g[:, None, None] * v / norm


def pack_tcn_params(params, kernel_size, compute_dtype=jnp.float32):
    """Resolve weight_norm and pre-pack conv weights as K per-tap (cout8, cin8)
    matrices (zero-padded to sublane multiples). Done ONCE, outside the forward."""
    K = kernel_size
    sub = 16 if jnp.dtype(compute_dtype).itemsize == 2 else 8   # bf16 sublane packing
    packed = []
    for p in params:
        w1 = weight_norm_effective(p["v1"], p["g1"])     # (cout, cin, K)
        cout, cin, _ = w1.shape
        cin8 = _round_up(cin, sub)
        cout8 = _round_up(cout, sub)
        w1p = (jnp.zeros((K, cout8, cin8), jnp.float32)
               .at[:, :cout, :cin].set(jnp.transpose(w1, (2, 0, 1)))
               .astype(compute_dtype))
        b1c = jnp.zeros((cout8, 1), jnp.float32).at[:cout, 0].set(p["b1"])
        w2 = weight_norm_effective(p["v2"], p["g2"])     # (cout, cout, K)
        w2p = (jnp.zeros((K, cout8, cout8), jnp.float32)
               .at[:, :cout, :cout].set(jnp.transpose(w2, (2, 0, 1)))
               .astype(compute_dtype))
        b2c = jnp.zeros((cout8, 1), jnp.float32).at[:cout, 0].set(p["b2"])
        d = dict(cin=cin, cout=cout, cin8=cin8, cout8=cout8,
                 dilation=p["dilation"], cdt=compute_dtype,
                 w1p=w1p, b1c=b1c, w2p=w2p, b2c=b2c, wdp=None, bdc=None)
        if p["wd"] is not None:
            d["wdp"] = (jnp.zeros((cout8, cin8), jnp.float32)
                        .at[:cout, :cin].set(p["wd"][:, :, 0])
                        .astype(compute_dtype))
            d["bdc"] = jnp.zeros((cout8, 1), jnp.float32).at[:cout, 0].set(p["bd"])
        packed.append(d)
    return packed


def init_tcn_params(key, num_inputs, num_channels, kernel_size):
    params = []
    in_c = num_inputs
    for i, out_c in enumerate(num_channels):
        key, k1, k2, k3, k4, k5, k6 = jax.random.split(key, 7)
        v1 = 0.01 * jax.random.normal(k1, (out_c, in_c, kernel_size), jnp.float32)
        g1 = jnp.sqrt(jnp.sum(v1 * v1, axis=(1, 2)))     # weight_norm g at init
        bnd1 = 1.0 / math.sqrt(in_c * kernel_size)
        b1 = jax.random.uniform(k2, (out_c,), jnp.float32, -bnd1, bnd1)

        v2 = 0.01 * jax.random.normal(k3, (out_c, out_c, kernel_size), jnp.float32)
        g2 = jnp.sqrt(jnp.sum(v2 * v2, axis=(1, 2)))
        bnd2 = 1.0 / math.sqrt(out_c * kernel_size)
        b2 = jax.random.uniform(k4, (out_c,), jnp.float32, -bnd2, bnd2)

        if in_c != out_c:
            wd = 0.01 * jax.random.normal(k5, (out_c, in_c, 1), jnp.float32)
            bndd = 1.0 / math.sqrt(in_c)
            bd = jax.random.uniform(k6, (out_c,), jnp.float32, -bndd, bndd)
        else:
            wd, bd = None, None

        params.append(
            dict(v1=v1, g1=g1, b1=b1, v2=v2, g2=g2, b2=b2, wd=wd, bd=bd, dilation=2 ** i)
        )
        in_c = out_c
    return params


# ---------------------------------------------------------------------------
# Pure-JAX reference (independent, lax.conv based, NCL layout)
# ---------------------------------------------------------------------------
def tcn_reference(params, x_ncl, kernel_size):
    x = x_ncl
    hp = jax.lax.Precision.HIGHEST
    for p in params:
        d = p["dilation"]
        pad = (kernel_size - 1) * d
        L = x.shape[2]
        w1 = weight_norm_effective(p["v1"], p["g1"])
        y = jax.lax.conv_general_dilated(
            x, w1, (1,), [(pad, pad)], rhs_dilation=(d,),
            dimension_numbers=("NCH", "OIH", "NCH"), precision=hp)
        y = jnp.maximum(y[:, :, :L] + p["b1"][None, :, None], 0.0)
        w2 = weight_norm_effective(p["v2"], p["g2"])
        y2 = jax.lax.conv_general_dilated(
            y, w2, (1,), [(pad, pad)], rhs_dilation=(d,),
            dimension_numbers=("NCH", "OIH", "NCH"), precision=hp)
        y2 = jnp.maximum(y2[:, :, :L] + p["b2"][None, :, None], 0.0)
        if p["wd"] is not None:
            res = jax.lax.conv_general_dilated(
                x, p["wd"], (1,), [(0, 0)],
                dimension_numbers=("NCH", "OIH", "NCH"), precision=hp)
            res = res + p["bd"][None, :, None]
        else:
            res = x
        x = jnp.maximum(y2 + res, 0.0)
    return x


# ---------------------------------------------------------------------------
if __name__ == "__main__":
    # TemporalConvNet(num_inputs=4, num_channels=[8, 8], kernel_size=3, dropout=0.2)
    num_inputs = 4
    num_channels = [8, 8]
    kernel_size = 3
    B, L = 2, 16

    key = jax.random.PRNGKey(0)
    key, xkey = jax.random.split(key)
    x = jax.random.normal(xkey, (B, num_inputs, L), jnp.float32)  # NCL like PyTorch

    params = init_tcn_params(key, num_inputs, num_channels, kernel_size)
    # f32 operands by default (v5e-safe, tight parity); pass
    # compute_dtype=jnp.bfloat16 on v6e/v7x for 2x MXU rate / half VMEM traffic.
    packed = pack_tcn_params(params, kernel_size)

    out = jax.block_until_ready(tcn_forward(packed, x, kernel_size))

    ref = jax.block_until_ready(tcn_reference(params, x, kernel_size))
    assert out.shape == (B, num_channels[-1], L), out.shape
    assert jnp.allclose(out, ref, atol=1e-4, rtol=1e-3), float(jnp.max(jnp.abs(out - ref)))

    print("KERNEL_OK")
</pallas_src>

<mosaic_0001>
module attributes {stable_mosaic.version = 11 : i64} {
  func.func @kernel(%arg0: i32, %arg1: memref<1x8x128xf32, #tpu.memory_space<vmem>>, %arg2: memref<3x8x8xf32, #tpu.memory_space<vmem>>, %arg3: memref<8x1xf32, #tpu.memory_space<vmem>>, %arg4: memref<3x8x8xf32, #tpu.memory_space<vmem>>, %arg5: memref<8x1xf32, #tpu.memory_space<vmem>>, %arg6: memref<8x8xf32, #tpu.memory_space<vmem>>, %arg7: memref<8x1xf32, #tpu.memory_space<vmem>>, %arg8: memref<3x8x8xf32, #tpu.memory_space<vmem>>, %arg9: memref<8x1xf32, #tpu.memory_space<vmem>>, %arg10: memref<3x8x8xf32, #tpu.memory_space<vmem>>, %arg11: memref<8x1xf32, #tpu.memory_space<vmem>>, %arg12: memref<1x8x128xf32, #tpu.memory_space<vmem>>, %arg13: memref<8x256xf32, #tpu.memory_space<vmem>>, %arg14: memref<8x256xf32, #tpu.memory_space<vmem>>) attributes {dimension_semantics = [#tpu.dimension_semantics<parallel>], iteration_bounds = array<i64: 2>, scalar_prefetch = 0 : i64, scratch_operands = 2 : i64, tpu.core_type = #tpu.core_type<tc>, window_params = [{transform_indices = @transform_0, window_bounds = array<i64: 1, 8, 128>}, {pipeline_mode = #tpu.pipeline_mode<synchronous>, transform_indices = @transform_1, window_bounds = array<i64: 3, 8, 8>}, {pipeline_mode = #tpu.pipeline_mode<synchronous>, transform_indices = @transform_2, window_bounds = array<i64: 8, 1>}, {pipeline_mode = #tpu.pipeline_mode<synchronous>, transform_indices = @transform_3, window_bounds = array<i64: 3, 8, 8>}, {pipeline_mode = #tpu.pipeline_mode<synchronous>, transform_indices = @transform_4, window_bounds = array<i64: 8, 1>}, {pipeline_mode = #tpu.pipeline_mode<synchronous>, transform_indices = @transform_5, window_bounds = array<i64: 8, 8>}, {pipeline_mode = #tpu.pipeline_mode<synchronous>, transform_indices = @transform_6, window_bounds = array<i64: 8, 1>}, {pipeline_mode = #tpu.pipeline_mode<synchronous>, transform_indices = @transform_7, window_bounds = array<i64: 3, 8, 8>}, {pipeline_mode = #tpu.pipeline_mode<synchronous>, transform_indices = @transform_8, window_bounds = array<i64: 8, 1>}, {pipeline_mode = #tpu.pipeline_mode<synchronous>, transform_indices = @transform_9, window_bounds = array<i64: 3, 8, 8>}, {pipeline_mode = #tpu.pipeline_mode<synchronous>, transform_indices = @transform_10, window_bounds = array<i64: 8, 1>}, {transform_indices = @transform_11, window_bounds = array<i64: 1, 8, 128>}]} {
    %cst = arith.constant 0.000000e+00 : f32
    %0 = vector.broadcast %cst : f32 to vector<8x128xf32>
    %c0 = arith.constant 0 : index
    %c0_0 = arith.constant 0 : index
    %1 = vector.load %arg13[%c0, %c0_0] : memref<8x256xf32, #tpu.memory_space<vmem>>, vector<8x128xf32>
    tpu.vector_store %arg13[%c0, %c0_0], %0 {strides = array<i32>} : memref<8x256xf32, #tpu.memory_space<vmem>>, vector<8x128xf32>,
    %cst_1 = arith.constant 0.000000e+00 : f32
    %2 = vector.broadcast %cst_1 : f32 to vector<8x128xf32>
    %c0_2 = arith.constant 0 : index
    %c0_3 = arith.constant 0 : index
    %3 = vector.load %arg14[%c0_2, %c0_3] : memref<8x256xf32, #tpu.memory_space<vmem>>, vector<8x128xf32>
    tpu.vector_store %arg14[%c0_2, %c0_3], %2 {strides = array<i32>} : memref<8x256xf32, #tpu.memory_space<vmem>>, vector<8x128xf32>,
    %c0_4 = arith.constant 0 : index
    %c0_5 = arith.constant 0 : index
    %c0_6 = arith.constant 0 : index
    %4 = vector.load %arg1[%c0_4, %c0_5, %c0_6] : memref<1x8x128xf32, #tpu.memory_space<vmem>>, vector<1x8x128xf32>
    %5 = vector.shape_cast %4 : vector<1x8x128xf32> to vector<8x128xf32>
    %c0_7 = arith.constant 0 : index
    %c128 = arith.constant 128 : index
    %6 = vector.load %arg13[%c0_7, %c128] : memref<8x256xf32, #tpu.memory_space<vmem>>, vector<8x128xf32>
    tpu.vector_store %arg13[%c0_7, %c128], %5 {strides = array<i32>} : memref<8x256xf32, #tpu.memory_space<vmem>>, vector<8x128xf32>,
    %c0_8 = arith.constant 0 : index
    %c128_9 = arith.constant 128 : index
    %7 = vector.load %arg13[%c0_8, %c128_9] : memref<8x256xf32, #tpu.memory_space<vmem>>, vector<8x128xf32>
    %c0_10 = arith.constant 0 : index
    %c0_11 = arith.constant 0 : index
    %8 = vector.load %arg3[%c0_10, %c0_11] : memref<8x1xf32, #tpu.memory_space<vmem>>, vector<8x1xf32>
    %c0_12 = arith.constant 0 : index
    %c126 = arith.constant 126 : index
    %9 = vector.load %arg13[%c0_12, %c126] : memref<8x256xf32, #tpu.memory_space<vmem>>, vector<8x128xf32>
    %c0_13 = arith.constant 0 : index
    %c0_14 = arith.constant 0 : index
    %c0_15 = arith.constant 0 : index
    %10 = vector.load %arg2[%c0_13, %c0_14, %c0_15] : memref<3x8x8xf32, #tpu.memory_space<vmem>>, vector<1x8x8xf32>
    %11 = vector.shape_cast %10 : vector<1x8x8xf32> to vector<8x8xf32>
    %cst_16 = arith.constant dense<0.000000e+00> : vector<8x128xf32>
    %12 = tpu.matmul %11, %9, %cst_16 {dimension_numbers = #tpu.dot_dimension_numbers<[1], [0], [0], [1], [0, 0, 1, 1], [], []>} : vector<8x8xf32>, vector<8x128xf32>, vector<8x128xf32> -> vector<8x128xf32>
    %13 = vector.broadcast %8 : vector<8x1xf32> to vector<8x128xf32>
    %14 = arith.addf %13, %12 : vector<8x128xf32>
    %c0_17 = arith.constant 0 : index
    %c127 = arith.constant 127 : index
    %15 = vector.load %arg13[%c0_17, %c127] : memref<8x256xf32, #tpu.memory_space<vmem>>, vector<8x128xf32>
    %c1 = arith.constant 1 : index
    %c0_18 = arith.constant 0 : index
    %c0_19 = arith.constant 0 : index
    %16 = vector.load %arg2[%c1, %c0_18, %c0_19] : memref<3x8x8xf32, #tpu.memory_space<vmem>>, vector<1x8x8xf32>
    %17 = vector.shape_cast %16 : vector<1x8x8xf32> to vector<8x8xf32>
    %cst_20 = arith.constant dense<0.000000e+00> : vector<8x128xf32>
    %18 = tpu.matmul %17, %15, %cst_20 {dimension_numbers = #tpu.dot_dimension_numbers<[1], [0], [0], [1], [0, 0, 1, 1], [], []>} : vector<8x8xf32>, vector<8x128xf32>, vector<8x128xf32> -> vector<8x128xf32>
    %19 = arith.addf %14, %18 : vector<8x128xf32>
    %c2 = arith.constant 2 : index
    %c0_21 = arith.constant 0 : index
    %c0_22 = arith.constant 0 : index
    %20 = vector.load %arg2[%c2, %c0_21, %c0_22] : memref<3x8x8xf32, #tpu.memory_space<vmem>>, vector<1x8x8xf32>
    %21 = vector.shape_cast %20 : vector<1x8x8xf32> to vector<8x8xf32>
    %cst_23 = arith.constant dense<0.000000e+00> : vector<8x128xf32>
    %22 = tpu.matmul %21, %7, %cst_23 {dimension_numbers = #tpu.dot_dimension_numbers<[1], [0], [0], [1], [0, 0, 1, 1], [], []>} : vector<8x8xf32>, vector<8x128xf32>, vector<8x128xf32> -> vector<8x128xf32>
    %23 = arith.addf %19, %22 : vector<8x128xf32>
    %cst_24 = arith.constant 0.000000e+00 : f32
    %24 = vector.broadcast %cst_24 : f32 to vector<8x128xf32>
    %25 = arith.maximumf %23, %24 : vector<8x128xf32>
    %c0_25 = arith.constant 0 : index
    %c128_26 = arith.constant 128 : index
    %26 = vector.load %arg14[%c0_25, %c128_26] : memref<8x256xf32, #tpu.memory_space<vmem>>, vector<8x128xf32>
    tpu.vector_store %arg14[%c0_25, %c128_26], %25 {strides = array<i32>} : memref<8x256xf32, #tpu.memory_space<vmem>>, vector<8x128xf32>,
    %c0_27 = arith.constant 0 : index
    %c0_28 = arith.constant 0 : index
    %27 = vector.load %arg5[%c0_27, %c0_28] : memref<8x1xf32, #tpu.memory_space<vmem>>, vector<8x1xf32>
    %c0_29 = arith.constant 0 : index
    %c0_30 = arith.constant 0 : index
    %c0_31 = arith.constant 0 : index
    %28 = vector.load %arg4[%c0_29, %c0_30, %c0_31] : memref<3x8x8xf32, #tpu.memory_space<vmem>>, vector<1x8x8xf32>
    %29 = vector.shape_cast %28 : vector<1x8x8xf32> to vector<8x8xf32>
    %c0_32 = arith.constant 0 : index
    %c126_33 = arith.constant 126 : index
    %30 = vector.load %arg14[%c0_32, %c126_33] : memref<8x256xf32, #tpu.memory_space<vmem>>, vector<8x128xf32>
    %cst_34 = arith.constant dense<0.000000e+00> : vector<8x128xf32>
    %31 = tpu.matmul %29, %30, %cst_34 {dimension_numbers = #tpu.dot_dimension_numbers<[1], [0], [0], [1], [0, 0, 1, 1], [], []>} : vector<8x8xf32>, vector<8x128xf32>, vector<8x128xf32> -> vector<8x128xf32>
    %32 = vector.broadcast %27 : vector<8x1xf32> to vector<8x128xf32>
    %33 = arith.addf %32, %31 : vector<8x128xf32>
    %c1_35 = arith.constant 1 : index
    %c0_36 = arith.constant 0 : index
    %c0_37 = arith.constant 0 : index
    %34 = vector.load %arg4[%c1_35, %c0_36, %c0_37] : memref<3x8x8xf32, #tpu.memory_space<vmem>>, vector<1x8x8xf32>
    %35 = vector.shape_cast %34 : vector<1x8x8xf32> to vector<8x8xf32>
    %c0_38 = arith.constant 0 : index
    %c127_39 = arith.constant 127 : index
    %36 = vector.load %arg14[%c0_38, %c127_39] : memref<8x256xf32, #tpu.memory_space<vmem>>, vector<8x128xf32>
    %cst_40 = arith.constant dense<0.000000e+00> : vector<8x128xf32>
    %37 = tpu.matmul %35, %36, %cst_40 {dimension_numbers = #tpu.dot_dimension_numbers<[1], [0], [0], [1], [0, 0, 1, 1], [], []>} : vector<8x8xf32>, vector<8x128xf32>, vector<8x128xf32> -> vector<8x128xf32>
    %38 = arith.addf %33, %37 : vector<8x128xf32>
    %c2_41 = arith.constant 2 : index
    %c0_42 = arith.constant 0 : index
    %c0_43 = arith.constant 0 : index
    %39 = vector.load %arg4[%c2_41, %c0_42, %c0_43] : memref<3x8x8xf32, #tpu.memory_space<vmem>>, vector<1x8x8xf32>
    %40 = vector.shape_cast %39 : vector<1x8x8xf32> to vector<8x8xf32>
    %c0_44 = arith.constant 0 : index
    %c128_45 = arith.constant 128 : index
    %41 = vector.load %arg14[%c0_44, %c128_45] : memref<8x256xf32, #tpu.memory_space<vmem>>, vector<8x128xf32>
    %cst_46 = arith.constant dense<0.000000e+00> : vector<8x128xf32>
    %42 = tpu.matmul %40, %41, %cst_46 {dimension_numbers = #tpu.dot_dimension_numbers<[1], [0], [0], [1], [0, 0, 1, 1], [], []>} : vector<8x8xf32>, vector<8x128xf32>, vector<8x128xf32> -> vector<8x128xf32>
    %43 = arith.addf %38, %42 : vector<8x128xf32>
    %cst_47 = arith.constant 0.000000e+00 : f32
    %44 = vector.broadcast %cst_47 : f32 to vector<8x128xf32>
    %45 = arith.maximumf %43, %44 : vector<8x128xf32>
    %c0_48 = arith.constant 0 : index
    %c0_49 = arith.constant 0 : index
    %46 = vector.load %arg6[%c0_48, %c0_49] : memref<8x8xf32, #tpu.memory_space<vmem>>, vector<8x8xf32>
    %cst_50 = arith.constant dense<0.000000e+00> : vector<8x128xf32>
    %47 = tpu.matmul %46, %7, %cst_50 {dimension_numbers = #tpu.dot_dimension_numbers<[1], [0], [0], [1], [0, 0, 1, 1], [], []>} : vector<8x8xf32>, vector<8x128xf32>, vector<8x128xf32> -> vector<8x128xf32>
    %c0_51 = arith.constant 0 : index
    %c0_52 = arith.constant 0 : index
    %48 = vector.load %arg7[%c0_51, %c0_52] : memref<8x1xf32, #tpu.memory_space<vmem>>, vector<8x1xf32>
    %49 = vector.broadcast %48 : vector<8x1xf32> to vector<8x128xf32>
    %50 = arith.addf %47, %49 : vector<8x128xf32>
    %51 = arith.addf %45, %50 : vector<8x128xf32>
    %cst_53 = arith.constant 0.000000e+00 : f32
    %52 = vector.broadcast %cst_53 : f32 to vector<8x128xf32>
    %53 = arith.maximumf %51, %52 : vector<8x128xf32>
    %c0_54 = arith.constant 0 : index
    %c128_55 = arith.constant 128 : index
    %54 = vector.load %arg13[%c0_54, %c128_55] : memref<8x256xf32, #tpu.memory_space<vmem>>, vector<8x128xf32>
    tpu.vector_store %arg13[%c0_54, %c128_55], %53 {strides = array<i32>} : memref<8x256xf32, #tpu.memory_space<vmem>>, vector<8x128xf32>,
    %c0_56 = arith.constant 0 : index
    %c128_57 = arith.constant 128 : index
    %55 = vector.load %arg13[%c0_56, %c128_57] : memref<8x256xf32, #tpu.memory_space<vmem>>, vector<8x128xf32>
    %c0_58 = arith.constant 0 : index
    %c0_59 = arith.constant 0 : index
    %56 = vector.load %arg9[%c0_58, %c0_59] : memref<8x1xf32, #tpu.memory_space<vmem>>, vector<8x1xf32>
    %c0_60 = arith.constant 0 : index
    %c124 = arith.constant 124 : index
    %57 = vector.load %arg13[%c0_60, %c124] : memref<8x256xf32, #tpu.memory_space<vmem>>, vector<8x128xf32>
    %c0_61 = arith.constant 0 : index
    %c0_62 = arith.constant 0 : index
    %c0_63 = arith.constant 0 : index
    %58 = vector.load %arg8[%c0_61, %c0_62, %c0_63] : memref<3x8x8xf32, #tpu.memory_space<vmem>>, vector<1x8x8xf32>
    %59 = vector.shape_cast %58 : vector<1x8x8xf32> to vector<8x8xf32>
    %cst_64 = arith.constant dense<0.000000e+00> : vector<8x128xf32>
    %60 = tpu.matmul %59, %57, %cst_64 {dimension_numbers = #tpu.dot_dimension_numbers<[1], [0], [0], [1], [0, 0, 1, 1], [], []>} : vector<8x8xf32>, vector<8x128xf32>, vector<8x128xf32> -> vector<8x128xf32>
    %61 = vector.broadcast %56 : vector<8x1xf32> to vector<8x128xf32>
    %62 = arith.addf %61, %60 : vector<8x128xf32>
    %c0_65 = arith.constant 0 : index
    %c126_66 = arith.constant 126 : index
    %63 = vector.load %arg13[%c0_65, %c126_66] : memref<8x256xf32, #tpu.memory_space<vmem>>, vector<8x128xf32>
    %c1_67 = arith.constant 1 : index
    %c0_68 = arith.constant 0 : index
    %c0_69 = arith.constant 0 : index
    %64 = vector.load %arg8[%c1_67, %c0_68, %c0_69] : memref<3x8x8xf32, #tpu.memory_space<vmem>>, vector<1x8x8xf32>
    %65 = vector.shape_cast %64 : vector<1x8x8xf32> to vector<8x8xf32>
    %cst_70 = arith.constant dense<0.000000e+00> : vector<8x128xf32>
    %66 = tpu.matmul %65, %63, %cst_70 {dimension_numbers = #tpu.dot_dimension_numbers<[1], [0], [0], [1], [0, 0, 1, 1], [], []>} : vector<8x8xf32>, vector<8x128xf32>, vector<8x128xf32> -> vector<8x128xf32>
    %67 = arith.addf %62, %66 : vector<8x128xf32>
    %c2_71 = arith.constant 2 : index
    %c0_72 = arith.constant 0 : index
    %c0_73 = arith.constant 0 : index
    %68 = vector.load %arg8[%c2_71, %c0_72, %c0_73] : memref<3x8x8xf32, #tpu.memory_space<vmem>>, vector<1x8x8xf32>
    %69 = vector.shape_cast %68 : vector<1x8x8xf32> to vector<8x8xf32>
    %cst_74 = arith.constant dense<0.000000e+00> : vector<8x128xf32>
    %70 = tpu.matmul %69, %55, %cst_74 {dimension_numbers = #tpu.dot_dimension_numbers<[1], [0], [0], [1], [0, 0, 1, 1], [], []>} : vector<8x8xf32>, vector<8x128xf32>, vector<8x128xf32> -> vector<8x128xf32>
    %71 = arith.addf %67, %70 : vector<8x128xf32>
    %cst_75 = arith.constant 0.000000e+00 : f32
    %72 = vector.broadcast %cst_75 : f32 to vector<8x128xf32>
    %73 = arith.maximumf %71, %72 : vector<8x128xf32>
    %c0_76 = arith.constant 0 : index
    %c128_77 = arith.constant 128 : index
    %74 = vector.load %arg14[%c0_76, %c128_77] : memref<8x256xf32, #tpu.memory_space<vmem>>, vector<8x128xf32>
    tpu.vector_store %arg14[%c0_76, %c128_77], %73 {strides = array<i32>} : memref<8x256xf32, #tpu.memory_space<vmem>>, vector<8x128xf32>,
    %c0_78 = arith.constant 0 : index
    %c0_79 = arith.constant 0 : index
    %75 = vector.load %arg11[%c0_78, %c0_79] : memref<8x1xf32, #tpu.memory_space<vmem>>, vector<8x1xf32>
    %c0_80 = arith.constant 0 : index
    %c0_81 = arith.constant 0 : index
    %c0_82 = arith.constant 0 : index
    %76 = vector.load %arg10[%c0_80, %c0_81, %c0_82] : memref<3x8x8xf32, #tpu.memory_space<vmem>>, vector<1x8x8xf32>
    %77 = vector.shape_cast %76 : vector<1x8x8xf32> to vector<8x8xf32>
    %c0_83 = arith.constant 0 : index
    %c124_84 = arith.constant 124 : index
    %78 = vector.load %arg14[%c0_83, %c124_84] : memref<8x256xf32, #tpu.memory_space<vmem>>, vector<8x128xf32>
    %cst_85 = arith.constant dense<0.000000e+00> : vector<8x128xf32>
    %79 = tpu.matmul %77, %78, %cst_85 {dimension_numbers = #tpu.dot_dimension_numbers<[1], [0], [0], [1], [0, 0, 1, 1], [], []>} : vector<8x8xf32>, vector<8x128xf32>, vector<8x128xf32> -> vector<8x128xf32>
    %80 = vector.broadcast %75 : vector<8x1xf32> to vector<8x128xf32>
    %81 = arith.addf %80, %79 : vector<8x128xf32>
    %c1_86 = arith.constant 1 : index
    %c0_87 = arith.constant 0 : index
    %c0_88 = arith.constant 0 : index
    %82 = vector.load %arg10[%c1_86, %c0_87, %c0_88] : memref<3x8x8xf32, #tpu.memory_space<vmem>>, vector<1x8x8xf32>
    %83 = vector.shape_cast %82 : vector<1x8x8xf32> to vector<8x8xf32>
    %c0_89 = arith.constant 0 : index
    %c126_90 = arith.constant 126 : index
    %84 = vector.load %arg14[%c0_89, %c126_90] : memref<8x256xf32, #tpu.memory_space<vmem>>, vector<8x128xf32>
    %cst_91 = arith.constant dense<0.000000e+00> : vector<8x128xf32>
    %85 = tpu.matmul %83, %84, %cst_91 {dimension_numbers = #tpu.dot_dimension_numbers<[1], [0], [0], [1], [0, 0, 1, 1], [], []>} : vector<8x8xf32>, vector<8x128xf32>, vector<8x128xf32> -> vector<8x128xf32>
    %86 = arith.addf %81, %85 : vector<8x128xf32>
    %c2_92 = arith.constant 2 : index
    %c0_93 = arith.constant 0 : index
    %c0_94 = arith.constant 0 : index
    %87 = vector.load %arg10[%c2_92, %c0_93, %c0_94] : memref<3x8x8xf32, #tpu.memory_space<vmem>>, vector<1x8x8xf32>
    %88 = vector.shape_cast %87 : vector<1x8x8xf32> to vector<8x8xf32>
    %c0_95 = arith.constant 0 : index
    %c128_96 = arith.constant 128 : index
    %89 = vector.load %arg14[%c0_95, %c128_96] : memref<8x256xf32, #tpu.memory_space<vmem>>, vector<8x128xf32>
    %cst_97 = arith.constant dense<0.000000e+00> : vector<8x128xf32>
    %90 = tpu.matmul %88, %89, %cst_97 {dimension_numbers = #tpu.dot_dimension_numbers<[1], [0], [0], [1], [0, 0, 1, 1], [], []>} : vector<8x8xf32>, vector<8x128xf32>, vector<8x128xf32> -> vector<8x128xf32>
    %91 = arith.addf %86, %90 : vector<8x128xf32>
    %cst_98 = arith.constant 0.000000e+00 : f32
    %92 = vector.broadcast %cst_98 : f32 to vector<8x128xf32>
    %93 = arith.maximumf %91, %92 : vector<8x128xf32>
    %94 = arith.addf %93, %55 : vector<8x128xf32>
    %cst_99 = arith.constant 0.000000e+00 : f32
    %95 = vector.broadcast %cst_99 : f32 to vector<8x128xf32>
    %96 = arith.maximumf %94, %95 : vector<8x128xf32>
    %c0_100 = arith.constant 0 : index
    %c0_101 = arith.constant 0 : index
    %c0_102 = arith.constant 0 : index
    %97 = vector.load %arg12[%c0_100, %c0_101, %c0_102] : memref<1x8x128xf32, #tpu.memory_space<vmem>>, vector<1x8x128xf32>
    %98 = vector.shape_cast %97 : vector<1x8x128xf32> to vector<8x128xf32>
    %99 = vector.shape_cast %96 : vector<8x128xf32> to vector<1x8x128xf32>
    tpu.vector_store %arg12[%c0_100, %c0_101, %c0_102], %99 {strides = array<i32>} : memref<1x8x128xf32, #tpu.memory_space<vmem>>, vector<1x8x128xf32>,
    return
  }
  func.func @transform_0(%arg0: i32) -> (i32, i32, i32) {
    %c0_i32 = arith.constant 0 : i32
    %c0_i32_0 = arith.constant 0 : i32
    %c0_i32_1 = arith.constant 0 : i32
    return %arg0, %c0_i32, %c0_i32_0 : i32, i32, i32
  }
  func.func @transform_1(%arg0: i32) -> (i32, i32, i32) {
    %c0_i32 = arith.constant 0 : i32
    %c0_i32_0 = arith.constant 0 : i32
    %c0_i32_1 = arith.constant 0 : i32
    %c0_i32_2 = arith.constant 0 : i32
    return %c0_i32, %c0_i32_0, %c0_i32_1 : i32, i32, i32
  }
  func.func @transform_2(%arg0: i32) -> (i32, i32) {
    %c0_i32 = arith.constant 0 : i32
    %c0_i32_0 = arith.constant 0 : i32
    %c0_i32_1 = arith.constant 0 : i32
    return %c0_i32, %c0_i32_0 : i32, i32
  }
  func.func @transform_3(%arg0: i32) -> (i32, i32, i32) {
    %c0_i32 = arith.constant 0 : i32
    %c0_i32_0 = arith.constant 0 : i32
    %c0_i32_1 = arith.constant 0 : i32
    %c0_i32_2 = arith.constant 0 : i32
    return %c0_i32, %c0_i32_0, %c0_i32_1 : i32, i32, i32
  }
  func.func @transform_4(%arg0: i32) -> (i32, i32) {
    %c0_i32 = arith.constant 0 : i32
    %c0_i32_0 = arith.constant 0 : i32
    %c0_i32_1 = arith.constant 0 : i32
    return %c0_i32, %c0_i32_0 : i32, i32
  }
  func.func @transform_5(%arg0: i32) -> (i32, i32) {
    %c0_i32 = arith.constant 0 : i32
    %c0_i32_0 = arith.constant 0 : i32
    %c0_i32_1 = arith.constant 0 : i32
    return %c0_i32, %c0_i32_0 : i32, i32
  }
  func.func @transform_6(%arg0: i32) -> (i32, i32) {
    %c0_i32 = arith.constant 0 : i32
    %c0_i32_0 = arith.constant 0 : i32
    %c0_i32_1 = arith.constant 0 : i32
    return %c0_i32, %c0_i32_0 : i32, i32
  }
  func.func @transform_7(%arg0: i32) -> (i32, i32, i32) {
    %c0_i32 = arith.constant 0 : i32
    %c0_i32_0 = arith.constant 0 : i32
    %c0_i32_1 = arith.constant 0 : i32
    %c0_i32_2 = arith.constant 0 : i32
    return %c0_i32, %c0_i32_0, %c0_i32_1 : i32, i32, i32
  }
  func.func @transform_8(%arg0: i32) -> (i32, i32) {
    %c0_i32 = arith.constant 0 : i32
    %c0_i32_0 = arith.constant 0 : i32
    %c0_i32_1 = arith.constant 0 : i32
    return %c0_i32, %c0_i32_0 : i32, i32
  }
  func.func @transform_9(%arg0: i32) -> (i32, i32, i32) {
    %c0_i32 = arith.constant 0 : i32
    %c0_i32_0 = arith.constant 0 : i32
    %c0_i32_1 = arith.constant 0 : i32
    %c0_i32_2 = arith.constant 0 : i32
    return %c0_i32, %c0_i32_0, %c0_i32_1 : i32, i32, i32
  }
  func.func @transform_10(%arg0: i32) -> (i32, i32) {
    %c0_i32 = arith.constant 0 : i32
    %c0_i32_0 = arith.constant 0 : i32
    %c0_i32_1 = arith.constant 0 : i32
    return %c0_i32, %c0_i32_0 : i32, i32
  }
  func.func @transform_11(%arg0: i32) -> (i32, i32, i32) {
    %c0_i32 = arith.constant 0 : i32
    %c0_i32_0 = arith.constant 0 : i32
    %c0_i32_1 = arith.constant 0 : i32
    return %arg0, %c0_i32, %c0_i32_0 : i32, i32, i32
  }
}

</mosaic_0001>

<llo_original>
// kernel: tpu_custom_call.1
$region0: #{tpu_custom_call.1}
  #allocation0 [shape = 'u32[]', space=smem, size = 0x4, offset = 0x4, fixed_abs, tag = 'smem constant byte address 0x4 - core index']
  #allocation1 [shape = 'u32[144,128]{1,0:T(1,128)}', space=vmem, size = 0x12000, scoped, tag = 'internal scratch']
  #allocation2 [shape = 'f32[8,256]{1,0:T(8,128)}', space=vmem, size = 0x2000, scoped, tag = 'scratch operand']
  #allocation3 [shape = 'f32[8,256]{1,0:T(8,128)}', space=vmem, size = 0x2000, scoped, tag = 'scratch operand']
  %s0 = inlined_call_operand.hbm [shape: f32[2,8,128], index: 0, kind: input, shape index: {}]
  %s1 = inlined_call_operand.vmem [shape: f32[3,8,8], index: 1, kind: input, shape index: {}]
  %s2 = inlined_call_operand.vmem [shape: f32[8,1], index: 2, kind: input, shape index: {}]
  %s3 = inlined_call_operand.vmem [shape: f32[3,8,8], index: 3, kind: input, shape index: {}]
  %s4 = inlined_call_operand.vmem [shape: f32[8,1], index: 4, kind: input, shape index: {}]
  %s5 = inlined_call_operand.hbm [shape: f32[8,8], index: 5, kind: input, shape index: {}]
  %s6 = inlined_call_operand.vmem [shape: f32[8,1], index: 6, kind: input, shape index: {}]
  %s7 = inlined_call_operand.hbm [shape: f32[3,8,8], index: 7, kind: input, shape index: {}]
  %s8 = inlined_call_operand.vmem [shape: f32[8,1], index: 8, kind: input, shape index: {}]
  %s9 = inlined_call_operand.vmem [shape: f32[3,8,8], index: 9, kind: input, shape index: {}]
  %s10 = inlined_call_operand.vmem [shape: f32[8,1], index: 10, kind: input, shape index: {}]
  %s11 = inlined_call_operand.hbm [shape: f32[2,8,128], index: 11, kind: output, shape index: {}]
  %s12 = sld [smem:[#allocation0]]
  $region89: #{tpu_custom_call.1} parent=0
    _
  %s14 = ssub.s32 1, %s12
  %s15 = scalar_select 0, %s14, %s12
  $region1: #{tpu_custom_call.1} parent=0
    #allocation4 [shape = 'u8[8192]{0}', space=vmem, size = 0x2000, scoped, tag = 'input window, operand 0']
    #allocation5 [shape = 's32[2]{0}', space=sflag, size = 0x8, scoped, tag = 'scoped memory for tpu_custom_call.1']
    #allocation6 [shape = 's32[2]{0}', space=sflag, size = 0x8, scoped, tag = 'scoped memory for tpu_custom_call.1']
    #allocation7 [shape = 'u8[4096]{0}', space=vmem, size = 0x1000, scoped, tag = 'input window, operand 5, single buffered']
    #allocation8 [shape = 's32[1]{0}', space=sflag, size = 0x4, scoped, tag = 'scoped memory for tpu_custom_call.1']
    #allocation9 [shape = 'u8[12288]{0}', space=vmem, size = 0x3000, scoped, tag = 'input window, operand 7, single buffered']
    #allocation10 [shape = 'u8[8192]{0}', space=vmem, size = 0x2000, scoped, tag = 'output window, operand 0']
    %16 = vsyncpa [#allocation5], 0
    %s17 = scalar_lea.sflag [#allocation5], 1
    %18 = vsyncpa %s17, 0
    %19 = vsyncpa [#allocation8], 0
    %20 = vsyncpa [#allocation6], 0
    %s21 = scalar_lea.sflag [#allocation6], 1
    %22 = vsyncpa %s21, 0
    loop: start=0, step=1, limit=4
    $region2: #{tpu_custom_call.1} parent=1 // loop_pre_header
      _
    $region3: #{tpu_custom_call.1} parent=1 // loop_header
      %s24 = sphi 0, %s28
      %p25 = scmp.ge.s32.totalorder %s24, 4
      %s34 = sphi 0, %s36
      %s37 = sphi 0, %s34
      %s38 = sphi 0, %s37
      %s54 = sphi 0, %s38
      %s58 = sphi 0, %s58
      %s60 = sphi 0, %s58
      %s61 = sphi 0, %s60
      %s75 = sphi 0, %s61
      %s79 = sphi 0, %s79
      %s81 = sphi 0, %s79
      %s82 = sphi 0, %s81
      %s96 = sphi 0, %s82
      %s100 = sphi 0, %s100
      %s102 = sphi 0, %s100
      %s103 = sphi 0, %s102
      %s117 = sphi 0, %s103
      %s121 = sphi 0, %s121
      %s123 = sphi 0, %s121
      %s124 = sphi 0, %s123
      %s138 = sphi 0, %s124
      %s142 = sphi 0, %s142
      %s144 = sphi 0, %s142
      %s145 = sphi 0, %s144
      %s159 = sphi 0, %s145
      %s163 = sphi 0, %s163
      %s165 = sphi 0, %s163
      %s166 = sphi 0, %s165
      %s180 = sphi 0, %s166
      %s184 = sphi 0, %s184
      %s186 = sphi 0, %s184
      %s187 = sphi 0, %s186
      %s201 = sphi 0, %s187
      %s205 = sphi 0, %s205
      %s207 = sphi 0, %s205
      %s208 = sphi 0, %s207
      %s222 = sphi 0, %s208
      %s226 = sphi 0, %s226
      %s228 = sphi 0, %s226
      %s229 = sphi 0, %s228
      %s243 = sphi 0, %s229
      %s247 = sphi 0, %s247
      %s249 = sphi 0, %s247
      %s250 = sphi 0, %s249
      %s264 = sphi 0, %s250
      %s270 = sphi 0, %s272
      %s273 = sphi 0, %s270
      %s274 = sphi 0, %s273
      %s290 = sphi 0, %s274
    $region4: #{tpu_custom_call.1} parent=1 // loop_header_branch
      %27 = sbr.rel (%p25) target = $region8
    $region5: #{tpu_custom_call.1} parent=1 // loop_body
      %s29 = ssub.s32 %s24, 1
      %s30 = ssub.s32 %s24, 2
      %s31 = sadd.s32 %s24, 1
      %s32 = ssub.s32 %s24, %s31
      %p33 = scmp.eq.s32.totalorder %s32, 0
      %s35 = sadd.s32 %s34, 1
      %s36 = scalar_select %p33, %s34, %s35
      %p39 = pneg %p33
      %p40 = scmp.eq.s32.totalorder %s24, 1
      %p41 = por %p39, %p40
      %p42 = scmp.ne.s32.totalorder %s34, %s37
      %p43 = scmp.eq.s32.totalorder %s24, 0
      %p44 = por %p42, %p43
      %p45 = scmp.ne.s32.totalorder %s34, %s37
      %p46 = scmp.eq.s32.totalorder %s29, 1
      %p47 = por %p45, %p46
      %p48 = scmp.ne.s32.totalorder %s37, %s38
      %p49 = scmp.eq.s32.totalorder %s29, 0
      %p50 = por %p48, %p49
      %p51 = scmp.ne.s32.totalorder %s37, %s38
      %p52 = scmp.eq.s32.totalorder %s30, 1
      %p53 = por %p51, %p52
      %p55 = scmp.ne.s32.totalorder %s38, %s54
      %p56 = scmp.eq.s32.totalorder %s30, 0
      %p57 = por %p55, %p56
      %s59 = sadd.s32 %s58, 1
      %p62 = scmp.eq.s32.totalorder %s24, 1
      %p63 = scmp.ne.s32.totalorder %s58, %s60
      %p64 = scmp.eq.s32.totalorder %s24, 0
      %p65 = por %p63, %p64
      %p66 = scmp.ne.s32.totalorder %s58, %s60
      %p67 = scmp.eq.s32.totalorder %s29, 1
      %p68 = por %p66, %p67
      %p69 = scmp.ne.s32.totalorder %s60, %s61
      %p70 = scmp.eq.s32.totalorder %s29, 0
      %p71 = por %p69, %p70
      %p72 = scmp.ne.s32.totalorder %s60, %s61
      %p73 = scmp.eq.s32.totalorder %s30, 1
      %p74 = por %p72, %p73
      %p76 = scmp.ne.s32.totalorder %s61, %s75
      %p77 = scmp.eq.s32.totalorder %s30, 0
      %p78 = por %p76, %p77
      %s80 = sadd.s32 %s79, 1
      %p83 = scmp.eq.s32.totalorder %s24, 1
      %p84 = scmp.ne.s32.totalorder %s79, %s81
      %p85 = scmp.eq.s32.totalorder %s24, 0
      %p86 = por %p84, %p85
      %p87 = scmp.ne.s32.totalorder %s79, %s81
      %p88 = scmp.eq.s32.totalorder %s29, 1
      %p89 = por %p87, %p88
      %p90 = scmp.ne.s32.totalorder %s81, %s82
      %p91 = scmp.eq.s32.totalorder %s29, 0
      %p92 = por %p90, %p91
      %p93 = scmp.ne.s32.totalorder %s81, %s82
      %p94 = scmp.eq.s32.totalorder %s30, 1
      %p95 = por %p93, %p94
      %p97 = scmp.ne.s32.totalorder %s82, %s96
      %p98 = scmp.eq.s32.totalorder %s30, 0
      %p99 = por %p97, %p98
      %s101 = sadd.s32 %s100, 1
      %p104 = scmp.eq.s32.totalorder %s24, 1
      %p105 = scmp.ne.s32.totalorder %s100, %s102
      %p106 = scmp.eq.s32.totalorder %s24, 0
      %p107 = por %p105, %p106
      %p108 = scmp.ne.s32.totalorder %s100, %s102
      %p109 = scmp.eq.s32.totalorder %s29, 1
      %p110 = por %p108, %p109
      %p111 = scmp.ne.s32.totalorder %s102, %s103
      %p112 = scmp.eq.s32.totalorder %s29, 0
      %p113 = por %p111, %p112
      %p114 = scmp.ne.s32.totalorder %s102, %s103
      %p115 = scmp.eq.s32.totalorder %s30, 1
      %p116 = por %p114, %p115
      %p118 = scmp.ne.s32.totalorder %s103, %s117
      %p119 = scmp.eq.s32.totalorder %s30, 0
      %p120 = por %p118, %p119
      %s122 = sadd.s32 %s121, 1
      %p125 = scmp.eq.s32.totalorder %s24, 1
      %p126 = scmp.ne.s32.totalorder %s121, %s123
      %p127 = scmp.eq.s32.totalorder %s24, 0
      %p128 = por %p126, %p127
      %p129 = scmp.ne.s32.totalorder %s121, %s123
      %p130 = scmp.eq.s32.totalorder %s29, 1
      %p131 = por %p129, %p130
      %p132 = scmp.ne.s32.totalorder %s123, %s124
      %p133 = scmp.eq.s32.totalorder %s29, 0
      %p134 = por %p132, %p133
      %p135 = scmp.ne.s32.totalorder %s123, %s124
      %p136 = scmp.eq.s32.totalorder %s30, 1
      %p137 = por %p135, %p136
      %p139 = scmp.ne.s32.totalorder %s124, %s138
      %p140 = scmp.eq.s32.totalorder %s30, 0
      %p141 = por %p139, %p140
      %s143 = sadd.s32 %s142, 1
      %p146 = scmp.eq.s32.totalorder %s24, 1
      %p147 = scmp.ne.s32.totalorder %s142, %s144
      %p148 = scmp.eq.s32.totalorder %s24, 0
      %p149 = por %p147, %p148
      %p150 = scmp.ne.s32.totalorder %s142, %s144
      %p151 = scmp.eq.s32.totalorder %s29, 1
      %p152 = por %p150, %p151
      %p153 = scmp.ne.s32.totalorder %s144, %s145
      %p154 = scmp.eq.s32.totalorder %s29, 0
      %p155 = por %p153, %p154
      %p156 = scmp.ne.s32.totalorder %s144, %s145
      %p157 = scmp.eq.s32.totalorder %s30, 1
      %p158 = por %p156, %p157
      %p160 = scmp.ne.s32.totalorder %s145, %s159
      %p161 = scmp.eq.s32.totalorder %s30, 0
      %p162 = por %p160, %p161
      %s164 = sadd.s32 %s163, 1
      %p167 = scmp.eq.s32.totalorder %s24, 1
      %p168 = scmp.ne.s32.totalorder %s163, %s165
      %p169 = scmp.eq.s32.totalorder %s24, 0
      %p170 = por %p168, %p169
      %p171 = scmp.ne.s32.totalorder %s163, %s165
      %p172 = scmp.eq.s32.totalorder %s29, 1
      %p173 = por %p171, %p172
      %p174 = scmp.ne.s32.totalorder %s165, %s166
      %p175 = scmp.eq.s32.totalorder %s29, 0
      %p176 = por %p174, %p175
      %p177 = scmp.ne.s32.totalorder %s165, %s166
      %p178 = scmp.eq.s32.totalorder %s30, 1
      %p179 = por %p177, %p178
      %p181 = scmp.ne.s32.totalorder %s166, %s180
      %p182 = scmp.eq.s32.totalorder %s30, 0
      %p183 = por %p181, %p182
      %s185 = sadd.s32 %s184, 1
      %p188 = scmp.eq.s32.totalorder %s24, 1
      %p189 = scmp.ne.s32.totalorder %s184, %s186
      %p190 = scmp.eq.s32.totalorder %s24, 0
      %p191 = por %p189, %p190
      %p192 = scmp.ne.s32.totalorder %s184, %s186
      %p193 = scmp.eq.s32.totalorder %s29, 1
      %p194 = por %p192, %p193
      %p195 = scmp.ne.s32.totalorder %s186, %s187
      %p196 = scmp.eq.s32.totalorder %s29, 0
      %p197 = por %p195, %p196
      %p198 = scmp.ne.s32.totalorder %s186, %s187
      %p199 = scmp.eq.s32.totalorder %s30, 1
      %p200 = por %p198, %p199
      %p202 = scmp.ne.s32.totalorder %s187, %s201
      %p203 = scmp.eq.s32.totalorder %s30, 0
      %p204 = por %p202, %p203
      %s206 = sadd.s32 %s205, 1
      %p209 = scmp.eq.s32.totalorder %s24, 1
      %p210 = scmp.ne.s32.totalorder %s205, %s207
      %p211 = scmp.eq.s32.totalorder %s24, 0
      %p212 = por %p210, %p211
      %p213 = scmp.ne.s32.totalorder %s205, %s207
      %p214 = scmp.eq.s32.totalorder %s29, 1
      %p215 = por %p213, %p214
      %p216 = scmp.ne.s32.totalorder %s207, %s208
      %p217 = scmp.eq.s32.totalorder %s29, 0
      %p218 = por %p216, %p217
      %p219 = scmp.ne.s32.totalorder %s207, %s208
      %p220 = scmp.eq.s32.totalorder %s30, 1
      %p221 = por %p219, %p220
      %p223 = scmp.ne.s32.totalorder %s208, %s222
      %p224 = scmp.eq.s32.totalorder %s30, 0
      %p225 = por %p223, %p224
      %s227 = sadd.s32 %s226, 1
      %p230 = scmp.eq.s32.totalorder %s24, 1
      %p231 = scmp.ne.s32.totalorder %s226, %s228
      %p232 = scmp.eq.s32.totalorder %s24, 0
      %p233 = por %p231, %p232
      %p234 = scmp.ne.s32.totalorder %s226, %s228
      %p235 = scmp.eq.s32.totalorder %s29, 1
      %p236 = por %p234, %p235
      %p237 = scmp.ne.s32.totalorder %s228, %s229
      %p238 = scmp.eq.s32.totalorder %s29, 0
      %p239 = por %p237, %p238
      %p240 = scmp.ne.s32.totalorder %s228, %s229
      %p241 = scmp.eq.s32.totalorder %s30, 1
      %p242 = por %p240, %p241
      %p244 = scmp.ne.s32.totalorder %s229, %s243
      %p245 = scmp.eq.s32.totalorder %s30, 0
      %p246 = por %p244, %p245
      %s248 = sadd.s32 %s247, 1
      %p251 = scmp.eq.s32.totalorder %s24, 1
      %p252 = scmp.ne.s32.totalorder %s247, %s249
      %p253 = scmp.eq.s32.totalorder %s24, 0
      %p254 = por %p252, %p253
      %p255 = scmp.ne.s32.totalorder %s247, %s249
      %p256 = scmp.eq.s32.totalorder %s29, 1
      %p257 = por %p255, %p256
      %p258 = scmp.ne.s32.totalorder %s249, %s250
      %p259 = scmp.eq.s32.totalorder %s29, 0
      %p260 = por %p258, %p259
      %p261 = scmp.ne.s32.totalorder %s249, %s250
      %p262 = scmp.eq.s32.totalorder %s30, 1
      %p263 = por %p261, %p262
      %p265 = scmp.ne.s32.totalorder %s250, %s264
      %p266 = scmp.eq.s32.totalorder %s30, 0
      %p267 = por %p265, %p266
      %s268 = ssub.s32 %s24, %s31
      %p269 = scmp.eq.s32.totalorder %s268, 0
      %s271 = sadd.s32 %s270, 1
      %s272 = scalar_select %p269, %s270, %s271
      %p275 = pneg %p269
      %p276 = scmp.eq.s32.totalorder %s24, 1
      %p277 = por %p275, %p276
      %p278 = scmp.ne.s32.totalorder %s270, %s273
      %p279 = scmp.eq.s32.totalorder %s24, 0
      %p280 = por %p278, %p279
      %p281 = scmp.ne.s32.totalorder %s270, %s273
      %p282 = scmp.eq.s32.totalorder %s29, 1
      %p283 = por %p281, %p282
      %p284 = scmp.ne.s32.totalorder %s273, %s274
      %p285 = scmp.eq.s32.totalorder %s29, 0
      %p286 = por %p284, %p285
      %p287 = scmp.ne.s32.totalorder %s273, %s274
      %p288 = scmp.eq.s32.totalorder %s30, 1
      %p289 = por %p287, %p288
      %p291 = scmp.ne.s32.totalorder %s274, %s290
      %p292 = scmp.eq.s32.totalorder %s30, 0
      %p293 = por %p291, %p292
      %p294 = scmp.le.s32.totalorder 1, %s24
      %p295 = scmp.lt.s32.totalorder %s24, 3
      %p296 = pnand %p294, %p295
      %p297 = pneg %p296
      // Predicated region
      $region9: #{tpu_custom_call.1} parent=5 // pred_check
        _
      $region10: #{tpu_custom_call.1} parent=5 // pred_check_branch
        %299 = sbr.rel (%p296) target = $region12
      $region11: #{tpu_custom_call.1} parent=5 // pred_region
        %s300 = ssub.s32 %s24, 1
        // Predicated region
        $region13: #{tpu_custom_call.1} parent=11 // pred_check
          %p301 = pneg %p71
        $region14: #{tpu_custom_call.1} parent=11 // pred_check_branch
          %303 = sbr.rel (%p301) target = $region16
        $region15: #{tpu_custom_call.1} parent=11 // pred_region
          _
        $region16: #{tpu_custom_call.1} parent=11 // pred_fallthru
          _
        // Predicated region
        $region17: #{tpu_custom_call.1} parent=11 // pred_check
          %p304 = pneg %p92
        $region18: #{tpu_custom_call.1} parent=11 // pred_check_branch
          %306 = sbr.rel (%p304) target = $region20
        $region19: #{tpu_custom_call.1} parent=11 // pred_region
          _
        $region20: #{tpu_custom_call.1} parent=11 // pred_fallthru
          _
        // Predicated region
        $region21: #{tpu_custom_call.1} parent=11 // pred_check
          %p307 = pneg %p113
        $region22: #{tpu_custom_call.1} parent=11 // pred_check_branch
          %309 = sbr.rel (%p307) target = $region24
        $region23: #{tpu_custom_call.1} parent=11 // pred_region
          _
        $region24: #{tpu_custom_call.1} parent=11 // pred_fallthru
          _
        // Predicated region
        $region25: #{tpu_custom_call.1} parent=11 // pred_check
          %p310 = pneg %p134
        $region26: #{tpu_custom_call.1} parent=11 // pred_check_branch
          %312 = sbr.rel (%p310) target = $region28
        $region27: #{tpu_custom_call.1} parent=11 // pred_region
          _
        $region28: #{tpu_custom_call.1} parent=11 // pred_fallthru
          _
        // Predicated region
        $region29: #{tpu_custom_call.1} parent=11 // pred_check
          %p313 = pneg %p155
        $region30: #{tpu_custom_call.1} parent=11 // pred_check_branch
          %315 = sbr.rel (%p313) target = $region32
        $region31: #{tpu_custom_call.1} parent=11 // pred_region
          %s317 = ssub.s32 128, 128
          %318 = vsyncadd [#allocation8], %s317
          %s320 = sshll.u32 [#allocation7], 4
          %s321 = int_to_ptr.vmem [resolvable:$true] %s320
          %323 = dma.hbm_to_vmem [thread:$0]  %s5, 128, %s321, [#allocation8]
        $region32: #{tpu_custom_call.1} parent=11 // pred_fallthru
          _
        // Predicated region
        $region33: #{tpu_custom_call.1} parent=11 // pred_check
          %p324 = pneg %p176
        $region34: #{tpu_custom_call.1} parent=11 // pred_check_branch
          %326 = sbr.rel (%p324) target = $region36
        $region35: #{tpu_custom_call.1} parent=11 // pred_region
          _
        $region36: #{tpu_custom_call.1} parent=11 // pred_fallthru
          _
        // Predicated region
        $region37: #{tpu_custom_call.1} parent=11 // pred_check
          %p327 = pneg %p197
        $region38: #{tpu_custom_call.1} parent=11 // pred_check_branch
          %329 = sbr.rel (%p327) target = $region40
        $region39: #{tpu_custom_call.1} parent=11 // pred_region
          %s331 = ssub.s32 384, 384
          %332 = vsyncadd [#allocation8], %s331
          %s333 = sshll.u32 [#allocation9], 4
          %s334 = int_to_ptr.vmem [resolvable:$true] %s333
          %339 = dma.hbm_to_vmem [thread:$0]  %s7, 384, %s334, [#allocation8], 128, 128, 8
        $region40: #{tpu_custom_call.1} parent=11 // pred_fallthru
          _
        // Predicated region
        $region41: #{tpu_custom_call.1} parent=11 // pred_check
          %p340 = pneg %p218
        $region42: #{tpu_custom_call.1} parent=11 // pred_check_branch
          %342 = sbr.rel (%p340) target = $region44
        $region43: #{tpu_custom_call.1} parent=11 // pred_region
          _
        $region44: #{tpu_custom_call.1} parent=11 // pred_fallthru
          _
        // Predicated region
        $region45: #{tpu_custom_call.1} parent=11 // pred_check
          %p343 = pneg %p239
        $region46: #{tpu_custom_call.1} parent=11 // pred_check_branch
          %345 = sbr.rel (%p343) target = $region48
        $region47: #{tpu_custom_call.1} parent=11 // pred_region
          _
        $region48: #{tpu_custom_call.1} parent=11 // pred_fallthru
          _
        // Predicated region
        $region49: #{tpu_custom_call.1} parent=11 // pred_check
          %p346 = pneg %p260
        $region50: #{tpu_custom_call.1} parent=11 // pred_check_branch
          %348 = sbr.rel (%p346) target = $region52
        $region51: #{tpu_custom_call.1} parent=11 // pred_region
          _
        $region52: #{tpu_custom_call.1} parent=11 // pred_fallthru
          _
      $region12: #{tpu_custom_call.1} parent=5 // pred_fallthru
        _
      %p349 = scmp.lt.s32.totalorder %s24, 2
      // Predicated region
      $region53: #{tpu_custom_call.1} parent=5 // pred_check
        %p350 = pneg %p349
      $region54: #{tpu_custom_call.1} parent=5 // pred_check_branch
        %352 = sbr.rel (%p350) target = $region56
      $region55: #{tpu_custom_call.1} parent=5 // pred_region
        // Predicated region
        $region57: #{tpu_custom_call.1} parent=55 // pred_check
          %p353 = pneg %p44
        $region58: #{tpu_custom_call.1} parent=55 // pred_check_branch
          %355 = sbr.rel (%p353) target = $region60
        $region59: #{tpu_custom_call.1} parent=55 // pred_region
          %s356 = sand.u32 %s34, 1
          %s357 = scalar_lea.sflag [#allocation5], %s356
          %s358 = sand.u32 %s34, 1
          %s359 = smul.addr %s358, 8
          %s360 = scalar_lea.vmem [#allocation4], %s359
          %s362 = ssub.s32 128, 128
          %363 = vsyncadd %s357, %s362
          %s364 = smul.addr %s24, 128
          %s365 = scalar_lea.hbm %s0, %s364
          %s367 = sshll.u32 %s360, 4
          %s368 = int_to_ptr.vmem [resolvable:$true] %s367
          %370 = dma.hbm_to_vmem [thread:$0]  %s365, 128, %s368, %s357
        $region60: #{tpu_custom_call.1} parent=55 // pred_fallthru
          _
      $region56: #{tpu_custom_call.1} parent=5 // pred_fallthru
        _
      %p371 = scmp.le.s32.totalorder 1, %s24
      %p372 = scmp.lt.s32.totalorder %s24, 3
      %p373 = pnand %p371, %p372
      %p374 = pneg %p373
      // Predicated region
      $region61: #{tpu_custom_call.1} parent=5 // pred_check
        _
      $region62: #{tpu_custom_call.1} parent=5 // pred_check_branch
        %376 = sbr.rel (%p373) target = $region64
      $region63: #{tpu_custom_call.1} parent=5 // pred_region
        %s377 = ssub.s32 %s24, 1
        %s378 = sand.u32 %s37, 1
        %s379 = scalar_lea.sflag [#allocation5], %s378
        %s380 = sand.u32 %s37, 1
        %s381 = smul.addr %s380, 8
        %s382 = scalar_lea.vmem [#allocation4], %s381
        // Predicated region
        $region65: #{tpu_custom_call.1} parent=63 // pred_check
          %p383 = pneg %p50
        $region66: #{tpu_custom_call.1} parent=63 // pred_check_branch
          %385 = sbr.rel (%p383) target = $region68
        $region67: #{tpu_custom_call.1} parent=63 // pred_region
          %386 = dma.done %s379, 128
        $region68: #{tpu_custom_call.1} parent=63 // pred_fallthru
          _
        // Predicated region
        $region69: #{tpu_custom_call.1} parent=63 // pred_check
          %p387 = pneg %p155
        $region70: #{tpu_custom_call.1} parent=63 // pred_check_branch
          %389 = sbr.rel (%p387) target = $region72
        $region71: #{tpu_custom_call.1} parent=63 // pred_region
          %390 = dma.done [#allocation8], 128
        $region72: #{tpu_custom_call.1} parent=63 // pred_fallthru
          _
        // Predicated region
        $region73: #{tpu_custom_call.1} parent=63 // pred_check
          %p391 = pneg %p197
        $region74: #{tpu_custom_call.1} parent=63 // pred_check_branch
          %393 = sbr.rel (%p391) target = $region76
        $region75: #{tpu_custom_call.1} parent=63 // pred_region
          %394 = dma.done [#allocation8], 384
        $region76: #{tpu_custom_call.1} parent=63 // pred_fallthru
          _
        %s395 = sand.u32 %s37, 1
        %s396 = scalar_lea.sflag [#allocation5], %s395
        %s397 = sand.u32 %s37, 1
        %s398 = smul.addr %s397, 8
        %s399 = scalar_lea.vmem [#allocation4], %s398
        %p400 = pneg %p50
        %p401 = pneg %p47
        %p402 = pneg %p71
        %p403 = pneg %p68
        %p404 = pneg %p92
        %p405 = pneg %p89
        %p406 = pneg %p113
        %p407 = pneg %p110
        %p408 = pneg %p134
        %p409 = pneg %p131
        %p410 = pneg %p155
        %p411 = pneg %p152
        %p412 = pneg %p176
        %p413 = pneg %p173
        %p414 = pneg %p197
        %p415 = pneg %p194
        %p416 = pneg %p218
        %p417 = pneg %p215
        %p418 = pneg %p239
        %p419 = pneg %p236
        %p420 = pneg %p260
        %p421 = pneg %p257
        %p422 = pneg %p286
        %p423 = pneg %p283
        %s424 = sand.u32 %s273, 1
        %s425 = scalar_lea.sflag [#allocation6], %s424
        %s426 = sand.u32 %s273, 1
        %s427 = smul.addr %s426, 8
        %s428 = scalar_lea.vmem [#allocation10], %s427
        %429 = vst [vmem:[#allocation2] sm:$0xff] 0.0
        %430 = vst [vmem:[#allocation3] sm:$0xff] 0.0
        %v431 = vld [vmem:[%s382] sm:$0xff]
        %432 = vst [vmem:[#allocation2 + $0x8] sm:$0xff] %v431
        %v433 = vld [vmem:[#allocation2 + $0x8] sm:$0xff]
        %v434 = vld [vmem:[%s2] sm:$0xff]
        %v435 = vld [vmem:[#allocation2] sm:$0xff]
        %v436 = vld [vmem:[%s1] sm:$0xff]
        %439 = vrot.lane.b32.xlu0 %v435, 2
        %v440 = vpop.permute.xlu0 %439
        %441 = vrot.lane.b32.xlu0 %v433, 2
        %v442 = vpop.permute.xlu0 %441
        %vm443 = vcmask 15360
        %v444 = vsel %vm443, %v440, %v442
        %vm446 = vcmask 64512
        %v448 = vsel %vm446, %v436, 0
        %450 = vmatprep.subr.mxu0 0.0
        %451 = vmatpush1.msra.mxu0 %v444
        %452 = vmatprep.subr.mxu0 0.0
        %453 = vmatpush1.msra.mxu0 0.0
        %454 = vmatprep.subr.mxu0 0.0
        %455 = vmatpush1.msra.mxu0 0.0
        %456 = vmatprep.subr.mxu0 0.0
        %457 = vmatpush1.msra.mxu0 0.0
        %458 = vmatprep.subr.mxu0 0.0
        %459 = vmatpush1.msra.mxu0 0.0
        %460 = vmatprep.subr.mxu0 0.0
        %461 = vmatpush1.msra.mxu0 0.0
        %462 = vmatprep.subr.mxu0 0.0
        %463 = vmatpush1.msra.mxu0 0.0
        %464 = vmatprep.subr.mxu0 0.0
        %465 = vmatpush1.msra.mxu0 0.0
        %466 = vmatprep.subr.mxu0 0.0
        %467 = vmatpush1.msra.mxu0 0.0
        %468 = vmatprep.subr.mxu0 0.0
        %469 = vmatpush1.msra.mxu0 0.0
        %470 = vmatprep.subr.mxu0 0.0
        %471 = vmatpush1.msra.mxu0 0.0
        %472 = vmatprep.subr.mxu0 0.0
        %473 = vmatpush1.msra.mxu0 0.0
        %474 = vmatprep.subr.mxu0 0.0
        %475 = vmatpush1.msra.mxu0 0.0
        %476 = vmatprep.subr.mxu0 0.0
        %477 = vmatpush1.msra.mxu0 0.0
        %478 = vmatprep.subr.mxu0 0.0
        %479 = vmatpush1.msra.mxu0 0.0
        %480 = vmatprep.subr.mxu0 0.0
        %481 = vmatpush1.msra.mxu0 0.0
        %482 = vmatprep.subr.mxu0 0.0
        %483 = vmatpush1.msra.mxu0 0.0
        %484 = vmatprep.subr.mxu0 0.0
        %485 = vmatpush1.msra.mxu0 0.0
        %486 = vmatprep.subr.mxu0 0.0
        %487 = vmatpush1.msra.mxu0 0.0
        %488 = vmatprep.subr.mxu0 0.0
        %489 = vmatpush1.msra.mxu0 0.0
        %490 = vmatprep.subr.mxu0 0.0
        %491 = vmatpush1.msra.mxu0 0.0
        %492 = vmatprep.subr.mxu0 0.0
        %493 = vmatpush1.msra.mxu0 0.0
        %494 = vmatprep.subr.mxu0 0.0
        %495 = vmatpush1.msra.mxu0 0.0
        %496 = vmatprep.subr.mxu0 0.0
        %497 = vmatpush1.msra.mxu0 0.0
        %498 = vmatprep.subr.mxu0 0.0
        %499 = vmatpush1.msra.mxu0 0.0
        %500 = vmatprep.subr.mxu0 0.0
        %501 = vmatpush1.msra.mxu0 0.0
        %502 = vmatprep.subr.mxu0 0.0
        %503 = vmatpush1.msra.mxu0 0.0
        %504 = vmatprep.subr.mxu0 0.0
        %505 = vmatpush1.msra.mxu0 0.0
        %506 = vmatprep.subr.mxu0 0.0
        %507 = vmatpush1.msra.mxu0 0.0
        %508 = vmatprep.subr.mxu0 0.0
        %509 = vmatpush1.msra.mxu0 0.0
        %510 = vmatprep.subr.mxu0 0.0
        %511 = vmatpush1.msra.mxu0 0.0
        %512 = vmatprep.subr.mxu0 0.0
        %513 = vmatpush1.msra.mxu0 0.0
        %514 = vmatprep.mubr.f32.mxu0 0.0
        %515 = vmatmul.mubr.f32.gmra.mrb[0].mxu0 %v448
        %v516 = vpop.f32.mrb[0].mxu0
        %v517 = vadd.f32 0.0, %v516
        %v518 = vpop.f32.mrb[0].mxu0
        %519 = vdwg.mxu0
        %521 = vset.pattern.permute.xlu0 0
        %522 = vperm.xlu0 %521, %v434
        %v523 = vpop.permute.xlu0 %522
        %v525 = vadd.f32 %v523, %v517
        %s526 = scalar_lea.vmem %s1, 8
        %v527 = vld [vmem:[%s526] sm:$0xff]
        %528 = vrot.lane.b32.xlu0 %v435, 1
        %v529 = vpop.permute.xlu0 %528
        %530 = vrot.lane.b32.xlu0 %v433, 1
        %v531 = vpop.permute.xlu0 %530
        %vm532 = vcmask 7168
        %v533 = vsel %vm532, %v529, %v531
        %v536 = vsel %vm446, %v527, 0
        %538 = vmatprep.subr.mxu0 0.0
        %539 = vmatpush1.msra.mxu0 %v533
        %540 = vmatprep.subr.mxu0 0.0
        %541 = vmatpush1.msra.mxu0 0.0
        %542 = vmatprep.subr.mxu0 0.0
        %543 = vmatpush1.msra.mxu0 0.0
        %544 = vmatprep.subr.mxu0 0.0
        %545 = vmatpush1.msra.mxu0 0.0
        %546 = vmatprep.subr.mxu0 0.0
        %547 = vmatpush1.msra.mxu0 0.0
        %548 = vmatprep.subr.mxu0 0.0
        %549 = vmatpush1.msra.mxu0 0.0
        %550 = vmatprep.subr.mxu0 0.0
        %551 = vmatpush1.msra.mxu0 0.0
        %552 = vmatprep.subr.mxu0 0.0
        %553 = vmatpush1.msra.mxu0 0.0
        %554 = vmatprep.subr.mxu0 0.0
        %555 = vmatpush1.msra.mxu0 0.0
        %556 = vmatprep.subr.mxu0 0.0
        %557 = vmatpush1.msra.mxu0 0.0
        %558 = vmatprep.subr.mxu0 0.0
        %559 = vmatpush1.msra.mxu0 0.0
        %560 = vmatprep.subr.mxu0 0.0
        %561 = vmatpush1.msra.mxu0 0.0
        %562 = vmatprep.subr.mxu0 0.0
        %563 = vmatpush1.msra.mxu0 0.0
        %564 = vmatprep.subr.mxu0 0.0
        %565 = vmatpush1.msra.mxu0 0.0
        %566 = vmatprep.subr.mxu0 0.0
        %567 = vmatpush1.msra.mxu0 0.0
        %568 = vmatprep.subr.mxu0 0.0
        %569 = vmatpush1.msra.mxu0 0.0
        %570 = vmatprep.subr.mxu0 0.0
        %571 = vmatpush1.msra.mxu0 0.0
        %572 = vmatprep.subr.mxu0 0.0
        %573 = vmatpush1.msra.mxu0 0.0
        %574 = vmatprep.subr.mxu0 0.0
        %575 = vmatpush1.msra.mxu0 0.0
        %576 = vmatprep.subr.mxu0 0.0
        %577 = vmatpush1.msra.mxu0 0.0
        %578 = vmatprep.subr.mxu0 0.0
        %579 = vmatpush1.msra.mxu0 0.0
        %580 = vmatprep.subr.mxu0 0.0
        %581 = vmatpush1.msra.mxu0 0.0
        %582 = vmatprep.subr.mxu0 0.0
        %583 = vmatpush1.msra.mxu0 0.0
        %584 = vmatprep.subr.mxu0 0.0
        %585 = vmatpush1.msra.mxu0 0.0
        %586 = vmatprep.subr.mxu0 0.0
        %587 = vmatpush1.msra.mxu0 0.0
        %588 = vmatprep.subr.mxu0 0.0
        %589 = vmatpush1.msra.mxu0 0.0
        %590 = vmatprep.subr.mxu0 0.0
        %591 = vmatpush1.msra.mxu0 0.0
        %592 = vmatprep.subr.mxu0 0.0
        %593 = vmatpush1.msra.mxu0 0.0
        %594 = vmatprep.subr.mxu0 0.0
        %595 = vmatpush1.msra.mxu0 0.0
        %596 = vmatprep.subr.mxu0 0.0
        %597 = vmatpush1.msra.mxu0 0.0
        %598 = vmatprep.subr.mxu0 0.0
        %599 = vmatpush1.msra.mxu0 0.0
        %600 = vmatprep.subr.mxu0 0.0
        %601 = vmatpush1.msra.mxu0 0.0
        %602 = vmatprep.mubr.f32.mxu0 0.0
        %603 = vmatmul.mubr.f32.gmra.mrb[0].mxu0 %v536
        %v604 = vpop.f32.mrb[0].mxu0
        %v605 = vadd.f32 0.0, %v604
        %v606 = vpop.f32.mrb[0].mxu0
        %607 = vdwg.mxu0
        %v608 = vadd.f32 %v525, %v605
        %s609 = scalar_lea.vmem %s1, 16
        %v610 = vld [vmem:[%s609] sm:$0xff]
        %v612 = vsel %vm446, %v610, 0
        %614 = vmatprep.subr.mxu0 0.0
        %615 = vmatpush1.msra.mxu0 %v433
        %616 = vmatprep.subr.mxu0 0.0
        %617 = vmatpush1.msra.mxu0 0.0
        %618 = vmatprep.subr.mxu0 0.0
        %619 = vmatpush1.msra.mxu0 0.0
        %620 = vmatprep.subr.mxu0 0.0
        %621 = vmatpush1.msra.mxu0 0.0
        %622 = vmatprep.subr.mxu0 0.0
        %623 = vmatpush1.msra.mxu0 0.0
        %624 = vmatprep.subr.mxu0 0.0
        %625 = vmatpush1.msra.mxu0 0.0
        %626 = vmatprep.subr.mxu0 0.0
        %627 = vmatpush1.msra.mxu0 0.0
        %628 = vmatprep.subr.mxu0 0.0
        %629 = vmatpush1.msra.mxu0 0.0
        %630 = vmatprep.subr.mxu0 0.0
        %631 = vmatpush1.msra.mxu0 0.0
        %632 = vmatprep.subr.mxu0 0.0
        %633 = vmatpush1.msra.mxu0 0.0
        %634 = vmatprep.subr.mxu0 0.0
        %635 = vmatpush1.msra.mxu0 0.0
        %636 = vmatprep.subr.mxu0 0.0
        %637 = vmatpush1.msra.mxu0 0.0
        %638 = vmatprep.subr.mxu0 0.0
        %639 = vmatpush1.msra.mxu0 0.0
        %640 = vmatprep.subr.mxu0 0.0
        %641 = vmatpush1.msra.mxu0 0.0
        %642 = vmatprep.subr.mxu0 0.0
        %643 = vmatpush1.msra.mxu0 0.0
        %644 = vmatprep.subr.mxu0 0.0
        %645 = vmatpush1.msra.mxu0 0.0
        %646 = vmatprep.subr.mxu0 0.0
        %647 = vmatpush1.msra.mxu0 0.0
        %648 = vmatprep.subr.mxu0 0.0
        %649 = vmatpush1.msra.mxu0 0.0
        %650 = vmatprep.subr.mxu0 0.0
        %651 = vmatpush1.msra.mxu0 0.0
        %652 = vmatprep.subr.mxu0 0.0
        %653 = vmatpush1.msra.mxu0 0.0
        %654 = vmatprep.subr.mxu0 0.0
        %655 = vmatpush1.msra.mxu0 0.0
        %656 = vmatprep.subr.mxu0 0.0
        %657 = vmatpush1.msra.mxu0 0.0
        %658 = vmatprep.subr.mxu0 0.0
        %659 = vmatpush1.msra.mxu0 0.0
        %660 = vmatprep.subr.mxu0 0.0
        %661 = vmatpush1.msra.mxu0 0.0
        %662 = vmatprep.subr.mxu0 0.0
        %663 = vmatpush1.msra.mxu0 0.0
        %664 = vmatprep.subr.mxu0 0.0
        %665 = vmatpush1.msra.mxu0 0.0
        %666 = vmatprep.subr.mxu0 0.0
        %667 = vmatpush1.msra.mxu0 0.0
        %668 = vmatprep.subr.mxu0 0.0
        %669 = vmatpush1.msra.mxu0 0.0
        %670 = vmatprep.subr.mxu0 0.0
        %671 = vmatpush1.msra.mxu0 0.0
        %672 = vmatprep.subr.mxu0 0.0
        %673 = vmatpush1.msra.mxu0 0.0
        %674 = vmatprep.subr.mxu0 0.0
        %675 = vmatpush1.msra.mxu0 0.0
        %676 = vmatprep.subr.mxu0 0.0
        %677 = vmatpush1.msra.mxu0 0.0
        %678 = vmatprep.mubr.f32.mxu0 0.0
        %679 = vmatmul.mubr.f32.gmra.mrb[0].mxu0 %v612
        %v680 = vpop.f32.mrb[0].mxu0
        %v681 = vadd.f32 0.0, %v680
        %v682 = vpop.f32.mrb[0].mxu0
        %683 = vdwg.mxu0
        %v684 = vadd.f32 %v608, %v681
        %v685 = vmax.f32 %v684, 0.0
        %686 = vst [vmem:[#allocation3 + $0x8] sm:$0xff] %v685
        %v687 = vld [vmem:[%s4] sm:$0xff]
        %v688 = vld [vmem:[%s3] sm:$0xff]
        %v689 = vld [vmem:[#allocation3] sm:$0xff]
        %v690 = vld [vmem:[#allocation3 + $0x8] sm:$0xff]
        %693 = vrot.lane.b32.xlu0 %v689, 2
        %v694 = vpop.permute.xlu0 %693
        %695 = vrot.lane.b32.xlu0 %v690, 2
        %v696 = vpop.permute.xlu0 %695
        %v697 = vsel %vm443, %v694, %v696
        %v700 = vsel %vm446, %v688, 0
        %702 = vmatprep.subr.mxu0 0.0
        %703 = vmatpush1.msra.mxu0 %v697
        %704 = vmatprep.subr.mxu0 0.0
        %705 = vmatpush1.msra.mxu0 0.0
        %706 = vmatprep.subr.mxu0 0.0
        %707 = vmatpush1.msra.mxu0 0.0
        %708 = vmatprep.subr.mxu0 0.0
        %709 = vmatpush1.msra.mxu0 0.0
        %710 = vmatprep.subr.mxu0 0.0
        %711 = vmatpush1.msra.mxu0 0.0
        %712 = vmatprep.subr.mxu0 0.0
        %713 = vmatpush1.msra.mxu0 0.0
        %714 = vmatprep.subr.mxu0 0.0
        %715 = vmatpush1.msra.mxu0 0.0
        %716 = vmatprep.subr.mxu0 0.0
        %717 = vmatpush1.msra.mxu0 0.0
        %718 = vmatprep.subr.mxu0 0.0
        %719 = vmatpush1.msra.mxu0 0.0
        %720 = vmatprep.subr.mxu0 0.0
        %721 = vmatpush1.msra.mxu0 0.0
        %722 = vmatprep.subr.mxu0 0.0
        %723 = vmatpush1.msra.mxu0 0.0
        %724 = vmatprep.subr.mxu0 0.0
        %725 = vmatpush1.msra.mxu0 0.0
        %726 = vmatprep.subr.mxu0 0.0
        %727 = vmatpush1.msra.mxu0 0.0
        %728 = vmatprep.subr.mxu0 0.0
        %729 = vmatpush1.msra.mxu0 0.0
        %730 = vmatprep.subr.mxu0 0.0
        %731 = vmatpush1.msra.mxu0 0.0
        %732 = vmatprep.subr.mxu0 0.0
        %733 = vmatpush1.msra.mxu0 0.0
        %734 = vmatprep.subr.mxu0 0.0
        %735 = vmatpush1.msra.mxu0 0.0
        %736 = vmatprep.subr.mxu0 0.0
        %737 = vmatpush1.msra.mxu0 0.0
        %738 = vmatprep.subr.mxu0 0.0
        %739 = vmatpush1.msra.mxu0 0.0
        %740 = vmatprep.subr.mxu0 0.0
        %741 = vmatpush1.msra.mxu0 0.0
        %742 = vmatprep.subr.mxu0 0.0
        %743 = vmatpush1.msra.mxu0 0.0
        %744 = vmatprep.subr.mxu0 0.0
        %745 = vmatpush1.msra.mxu0 0.0
        %746 = vmatprep.subr.mxu0 0.0
        %747 = vmatpush1.msra.mxu0 0.0
        %748 = vmatprep.subr.mxu0 0.0
        %749 = vmatpush1.msra.mxu0 0.0
        %750 = vmatprep.subr.mxu0 0.0
        %751 = vmatpush1.msra.mxu0 0.0
        %752 = vmatprep.subr.mxu0 0.0
        %753 = vmatpush1.msra.mxu0 0.0
        %754 = vmatprep.subr.mxu0 0.0
        %755 = vmatpush1.msra.mxu0 0.0
        %756 = vmatprep.subr.mxu0 0.0
        %757 = vmatpush1.msra.mxu0 0.0
        %758 = vmatprep.subr.mxu0 0.0
        %759 = vmatpush1.msra.mxu0 0.0
        %760 = vmatprep.subr.mxu0 0.0
        %761 = vmatpush1.msra.mxu0 0.0
        %762 = vmatprep.subr.mxu0 0.0
        %763 = vmatpush1.msra.mxu0 0.0
        %764 = vmatprep.subr.mxu0 0.0
        %765 = vmatpush1.msra.mxu0 0.0
        %766 = vmatprep.mubr.f32.mxu0 0.0
        %767 = vmatmul.mubr.f32.gmra.mrb[0].mxu0 %v700
        %v768 = vpop.f32.mrb[0].mxu0
        %v769 = vadd.f32 0.0, %v768
        %v770 = vpop.f32.mrb[0].mxu0
        %771 = vdwg.mxu0
        %773 = vset.pattern.permute.xlu0 0
        %774 = vperm.xlu0 %773, %v687
        %v775 = vpop.permute.xlu0 %774
        %v777 = vadd.f32 %v775, %v769
        %s778 = scalar_lea.vmem %s3, 8
        %v779 = vld [vmem:[%s778] sm:$0xff]
        %780 = vrot.lane.b32.xlu0 %v689, 1
        %v781 = vpop.permute.xlu0 %780
        %782 = vrot.lane.b32.xlu0 %v690, 1
        %v783 = vpop.permute.xlu0 %782
        %v784 = vsel %vm532, %v781, %v783
        %v787 = vsel %vm446, %v779, 0
        %789 = vmatprep.subr.mxu0 0.0
        %790 = vmatpush1.msra.mxu0 %v784
        %791 = vmatprep.subr.mxu0 0.0
        %792 = vmatpush1.msra.mxu0 0.0
        %793 = vmatprep.subr.mxu0 0.0
        %794 = vmatpush1.msra.mxu0 0.0
        %795 = vmatprep.subr.mxu0 0.0
        %796 = vmatpush1.msra.mxu0 0.0
        %797 = vmatprep.subr.mxu0 0.0
        %798 = vmatpush1.msra.mxu0 0.0
        %799 = vmatprep.subr.mxu0 0.0
        %800 = vmatpush1.msra.mxu0 0.0
        %801 = vmatprep.subr.mxu0 0.0
        %802 = vmatpush1.msra.mxu0 0.0
        %803 = vmatprep.subr.mxu0 0.0
        %804 = vmatpush1.msra.mxu0 0.0
        %805 = vmatprep.subr.mxu0 0.0
        %806 = vmatpush1.msra.mxu0 0.0
        %807 = vmatprep.subr.mxu0 0.0
        %808 = vmatpush1.msra.mxu0 0.0
        %809 = vmatprep.subr.mxu0 0.0
        %810 = vmatpush1.msra.mxu0 0.0
        %811 = vmatprep.subr.mxu0 0.0
        %812 = vmatpush1.msra.mxu0 0.0
        %813 = vmatprep.subr.mxu0 0.0
        %814 = vmatpush1.msra.mxu0 0.0
        %815 = vmatprep.subr.mxu0 0.0
        %816 = vmatpush1.msra.mxu0 0.0
        %817 = vmatprep.subr.mxu0 0.0
        %818 = vmatpush1.msra.mxu0 0.0
        %819 = vmatprep.subr.mxu0 0.0
        %820 = vmatpush1.msra.mxu0 0.0
        %821 = vmatprep.subr.mxu0 0.0
        %822 = vmatpush1.msra.mxu0 0.0
        %823 = vmatprep.subr.mxu0 0.0
        %824 = vmatpush1.msra.mxu0 0.0
        %825 = vmatprep.subr.mxu0 0.0
        %826 = vmatpush1.msra.mxu0 0.0
        %827 = vmatprep.subr.mxu0 0.0
        %828 = vmatpush1.msra.mxu0 0.0
        %829 = vmatprep.subr.mxu0 0.0
        %830 = vmatpush1.msra.mxu0 0.0
        %831 = vmatprep.subr.mxu0 0.0
        %832 = vmatpush1.msra.mxu0 0.0
        %833 = vmatprep.subr.mxu0 0.0
        %834 = vmatpush1.msra.mxu0 0.0
        %835 = vmatprep.subr.mxu0 0.0
        %836 = vmatpush1.msra.mxu0 0.0
        %837 = vmatprep.subr.mxu0 0.0
        %838 = vmatpush1.msra.mxu0 0.0
        %839 = vmatprep.subr.mxu0 0.0
        %840 = vmatpush1.msra.mxu0 0.0
        %841 = vmatprep.subr.mxu0 0.0
        %842 = vmatpush1.msra.mxu0 0.0
        %843 = vmatprep.subr.mxu0 0.0
        %844 = vmatpush1.msra.mxu0 0.0
        %845 = vmatprep.subr.mxu0 0.0
        %846 = vmatpush1.msra.mxu0 0.0
        %847 = vmatprep.subr.mxu0 0.0
        %848 = vmatpush1.msra.mxu0 0.0
        %849 = vmatprep.subr.mxu0 0.0
        %850 = vmatpush1.msra.mxu0 0.0
        %851 = vmatprep.subr.mxu0 0.0
        %852 = vmatpush1.msra.mxu0 0.0
        %853 = vmatprep.mubr.f32.mxu0 0.0
        %854 = vmatmul.mubr.f32.gmra.mrb[0].mxu0 %v787
        %v855 = vpop.f32.mrb[0].mxu0
        %v856 = vadd.f32 0.0, %v855
        %v857 = vpop.f32.mrb[0].mxu0
        %858 = vdwg.mxu0
        %v859 = vadd.f32 %v777, %v856
        %s860 = scalar_lea.vmem %s3, 16
        %v861 = vld [vmem:[%s860] sm:$0xff]
        %v863 = vsel %vm446, %v861, 0
        %865 = vmatprep.subr.mxu0 0.0
        %866 = vmatpush1.msra.mxu0 %v690
        %867 = vmatprep.subr.mxu0 0.0
        %868 = vmatpush1.msra.mxu0 0.0
        %869 = vmatprep.subr.mxu0 0.0
        %870 = vmatpush1.msra.mxu0 0.0
        %871 = vmatprep.subr.mxu0 0.0
        %872 = vmatpush1.msra.mxu0 0.0
        %873 = vmatprep.subr.mxu0 0.0
        %874 = vmatpush1.msra.mxu0 0.0
        %875 = vmatprep.subr.mxu0 0.0
        %876 = vmatpush1.msra.mxu0 0.0
        %877 = vmatprep.subr.mxu0 0.0
        %878 = vmatpush1.msra.mxu0 0.0
        %879 = vmatprep.subr.mxu0 0.0
        %880 = vmatpush1.msra.mxu0 0.0
        %881 = vmatprep.subr.mxu0 0.0
        %882 = vmatpush1.msra.mxu0 0.0
        %883 = vmatprep.subr.mxu0 0.0
        %884 = vmatpush1.msra.mxu0 0.0
        %885 = vmatprep.subr.mxu0 0.0
        %886 = vmatpush1.msra.mxu0 0.0
        %887 = vmatprep.subr.mxu0 0.0
        %888 = vmatpush1.msra.mxu0 0.0
        %889 = vmatprep.subr.mxu0 0.0
        %890 = vmatpush1.msra.mxu0 0.0
        %891 = vmatprep.subr.mxu0 0.0
        %892 = vmatpush1.msra.mxu0 0.0
        %893 = vmatprep.subr.mxu0 0.0
        %894 = vmatpush1.msra.mxu0 0.0
        %895 = vmatprep.subr.mxu0 0.0
        %896 = vmatpush1.msra.mxu0 0.0
        %897 = vmatprep.subr.mxu0 0.0
        %898 = vmatpush1.msra.mxu0 0.0
        %899 = vmatprep.subr.mxu0 0.0
        %900 = vmatpush1.msra.mxu0 0.0
        %901 = vmatprep.subr.mxu0 0.0
        %902 = vmatpush1.msra.mxu0 0.0
        %903 = vmatprep.subr.mxu0 0.0
        %904 = vmatpush1.msra.mxu0 0.0
        %905 = vmatprep.subr.mxu0 0.0
        %906 = vmatpush1.msra.mxu0 0.0
        %907 = vmatprep.subr.mxu0 0.0
        %908 = vmatpush1.msra.mxu0 0.0
        %909 = vmatprep.subr.mxu0 0.0
        %910 = vmatpush1.msra.mxu0 0.0
        %911 = vmatprep.subr.mxu0 0.0
        %912 = vmatpush1.msra.mxu0 0.0
        %913 = vmatprep.subr.mxu0 0.0
        %914 = vmatpush1.msra.mxu0 0.0
        %915 = vmatprep.subr.mxu0 0.0
        %916 = vmatpush1.msra.mxu0 0.0
        %917 = vmatprep.subr.mxu0 0.0
        %918 = vmatpush1.msra.mxu0 0.0
        %919 = vmatprep.subr.mxu0 0.0
        %920 = vmatpush1.msra.mxu0 0.0
        %921 = vmatprep.subr.mxu0 0.0
        %922 = vmatpush1.msra.mxu0 0.0
        %923 = vmatprep.subr.mxu0 0.0
        %924 = vmatpush1.msra.mxu0 0.0
        %925 = vmatprep.subr.mxu0 0.0
        %926 = vmatpush1.msra.mxu0 0.0
        %927 = vmatprep.subr.mxu0 0.0
        %928 = vmatpush1.msra.mxu0 0.0
        %929 = vmatprep.mubr.f32.mxu0 0.0
        %930 = vmatmul.mubr.f32.gmra.mrb[0].mxu0 %v863
        %v931 = vpop.f32.mrb[0].mxu0
        %v932 = vadd.f32 0.0, %v931
        %v933 = vpop.f32.mrb[0].mxu0
        %934 = vdwg.mxu0
        %v935 = vadd.f32 %v859, %v932
        %v936 = vmax.f32 %v935, 0.0
        %v937 = vld [vmem:[#allocation7] sm:$0xff]
        %v938 = vld [vmem:[%s6] sm:$0xff]
        %940 = vset.pattern.permute.xlu0 0
        %941 = vperm.xlu0 %940, %v938
        %v942 = vpop.permute.xlu0 %941
        %v945 = vsel %vm446, %v937, 0
        %947 = vmatprep.subr.mxu0 0.0
        %948 = vmatpush1.msra.mxu0 %v433
        %949 = vmatprep.subr.mxu0 0.0
        %950 = vmatpush1.msra.mxu0 0.0
        %951 = vmatprep.subr.mxu0 0.0
        %952 = vmatpush1.msra.mxu0 0.0
        %953 = vmatprep.subr.mxu0 0.0
        %954 = vmatpush1.msra.mxu0 0.0
        %955 = vmatprep.subr.mxu0 0.0
        %956 = vmatpush1.msra.mxu0 0.0
        %957 = vmatprep.subr.mxu0 0.0
        %958 = vmatpush1.msra.mxu0 0.0
        %959 = vmatprep.subr.mxu0 0.0
        %960 = vmatpush1.msra.mxu0 0.0
        %961 = vmatprep.subr.mxu0 0.0
        %962 = vmatpush1.msra.mxu0 0.0
        %963 = vmatprep.subr.mxu0 0.0
        %964 = vmatpush1.msra.mxu0 0.0
        %965 = vmatprep.subr.mxu0 0.0
        %966 = vmatpush1.msra.mxu0 0.0
        %967 = vmatprep.subr.mxu0 0.0
        %968 = vmatpush1.msra.mxu0 0.0
        %969 = vmatprep.subr.mxu0 0.0
        %970 = vmatpush1.msra.mxu0 0.0
        %971 = vmatprep.subr.mxu0 0.0
        %972 = vmatpush1.msra.mxu0 0.0
        %973 = vmatprep.subr.mxu0 0.0
        %974 = vmatpush1.msra.mxu0 0.0
        %975 = vmatprep.subr.mxu0 0.0
        %976 = vmatpush1.msra.mxu0 0.0
        %977 = vmatprep.subr.mxu0 0.0
        %978 = vmatpush1.msra.mxu0 0.0
        %979 = vmatprep.subr.mxu0 0.0
        %980 = vmatpush1.msra.mxu0 0.0
        %981 = vmatprep.subr.mxu0 0.0
        %982 = vmatpush1.msra.mxu0 0.0
        %983 = vmatprep.subr.mxu0 0.0
        %984 = vmatpush1.msra.mxu0 0.0
        %985 = vmatprep.subr.mxu0 0.0
        %986 = vmatpush1.msra.mxu0 0.0
        %987 = vmatprep.subr.mxu0 0.0
        %988 = vmatpush1.msra.mxu0 0.0
        %989 = vmatprep.subr.mxu0 0.0
        %990 = vmatpush1.msra.mxu0 0.0
        %991 = vmatprep.subr.mxu0 0.0
        %992 = vmatpush1.msra.mxu0 0.0
        %993 = vmatprep.subr.mxu0 0.0
        %994 = vmatpush1.msra.mxu0 0.0
        %995 = vmatprep.subr.mxu0 0.0
        %996 = vmatpush1.msra.mxu0 0.0
        %997 = vmatprep.subr.mxu0 0.0
        %998 = vmatpush1.msra.mxu0 0.0
        %999 = vmatprep.subr.mxu0 0.0
        %1000 = vmatpush1.msra.mxu0 0.0
        %1001 = vmatprep.subr.mxu0 0.0
        %1002 = vmatpush1.msra.mxu0 0.0
        %1003 = vmatprep.subr.mxu0 0.0
        %1004 = vmatpush1.msra.mxu0 0.0
        %1005 = vmatprep.subr.mxu0 0.0
        %1006 = vmatpush1.msra.mxu0 0.0
        %1007 = vmatprep.subr.mxu0 0.0
        %1008 = vmatpush1.msra.mxu0 0.0
        %1009 = vmatprep.subr.mxu0 0.0
        %1010 = vmatpush1.msra.mxu0 0.0
        %1011 = vmatprep.mubr.f32.mxu0 0.0
        %1012 = vmatmul.mubr.f32.gmra.mrb[0].mxu0 %v945
        %v1013 = vpop.f32.mrb[0].mxu0
        %v1014 = vadd.f32 %v942, %v1013
        %v1015 = vpop.f32.mrb[0].mxu0
        %1016 = vdwg.mxu0
        %v1017 = vadd.f32 %v936, %v1014
        %v1018 = vmax.f32 %v1017, 0.0
        %1019 = vst [vmem:[#allocation2 + $0x8] sm:$0xff] %v1018
        %v1020 = vld [vmem:[#allocation2 + $0x8] sm:$0xff]
        %v1021 = vld [vmem:[%s8] sm:$0xff]
        %v1022 = vld [vmem:[#allocation2] sm:$0xff]
        %v1023 = vld [vmem:[#allocation9] sm:$0xff]
        %1026 = vrot.lane.b32.xlu0 %v1022, 4
        %v1027 = vpop.permute.xlu0 %1026
        %1028 = vrot.lane.b32.xlu0 %v1020, 4
        %v1029 = vpop.permute.xlu0 %1028
        %vm1030 = vcmask 31744
        %v1031 = vsel %vm1030, %v1027, %v1029
        %v1034 = vsel %vm446, %v1023, 0
        %1036 = vmatprep.subr.mxu0 0.0
        %1037 = vmatpush1.msra.mxu0 %v1031
        %1038 = vmatprep.subr.mxu0 0.0
        %1039 = vmatpush1.msra.mxu0 0.0
        %1040 = vmatprep.subr.mxu0 0.0
        %1041 = vmatpush1.msra.mxu0 0.0
        %1042 = vmatprep.subr.mxu0 0.0
        %1043 = vmatpush1.msra.mxu0 0.0
        %1044 = vmatprep.subr.mxu0 0.0
        %1045 = vmatpush1.msra.mxu0 0.0
        %1046 = vmatprep.subr.mxu0 0.0
        %1047 = vmatpush1.msra.mxu0 0.0
        %1048 = vmatprep.subr.mxu0 0.0
        %1049 = vmatpush1.msra.mxu0 0.0
        %1050 = vmatprep.subr.mxu0 0.0
        %1051 = vmatpush1.msra.mxu0 0.0
        %1052 = vmatprep.subr.mxu0 0.0
        %1053 = vmatpush1.msra.mxu0 0.0
        %1054 = vmatprep.subr.mxu0 0.0
        %1055 = vmatpush1.msra.mxu0 0.0
        %1056 = vmatprep.subr.mxu0 0.0
        %1057 = vmatpush1.msra.mxu0 0.0
        %1058 = vmatprep.subr.mxu0 0.0
        %1059 = vmatpush1.msra.mxu0 0.0
        %1060 = vmatprep.subr.mxu0 0.0
        %1061 = vmatpush1.msra.mxu0 0.0
        %1062 = vmatprep.subr.mxu0 0.0
        %1063 = vmatpush1.msra.mxu0 0.0
        %1064 = vmatprep.subr.mxu0 0.0
        %1065 = vmatpush1.msra.mxu0 0.0
        %1066 = vmatprep.subr.mxu0 0.0
        %1067 = vmatpush1.msra.mxu0 0.0
        %1068 = vmatprep.subr.mxu0 0.0
        %1069 = vmatpush1.msra.mxu0 0.0
        %1070 = vmatprep.subr.mxu0 0.0
        %1071 = vmatpush1.msra.mxu0 0.0
        %1072 = vmatprep.subr.mxu0 0.0
        %1073 = vmatpush1.msra.mxu0 0.0
        %1074 = vmatprep.subr.mxu0 0.0
        %1075 = vmatpush1.msra.mxu0 0.0
        %1076 = vmatprep.subr.mxu0 0.0
        %1077 = vmatpush1.msra.mxu0 0.0
        %1078 = vmatprep.subr.mxu0 0.0
        %1079 = vmatpush1.msra.mxu0 0.0
        %1080 = vmatprep.subr.mxu0 0.0
        %1081 = vmatpush1.msra.mxu0 0.0
        %1082 = vmatprep.subr.mxu0 0.0
        %1083 = vmatpush1.msra.mxu0 0.0
        %1084 = vmatprep.subr.mxu0 0.0
        %1085 = vmatpush1.msra.mxu0 0.0
        %1086 = vmatprep.subr.mxu0 0.0
        %1087 = vmatpush1.msra.mxu0 0.0
        %1088 = vmatprep.subr.mxu0 0.0
        %1089 = vmatpush1.msra.mxu0 0.0
        %1090 = vmatprep.subr.mxu0 0.0
        %1091 = vmatpush1.msra.mxu0 0.0
        %1092 = vmatprep.subr.mxu0 0.0
        %1093 = vmatpush1.msra.mxu0 0.0
        %1094 = vmatprep.subr.mxu0 0.0
        %1095 = vmatpush1.msra.mxu0 0.0
        %1096 = vmatprep.subr.mxu0 0.0
        %1097 = vmatpush1.msra.mxu0 0.0
        %1098 = vmatprep.subr.mxu0 0.0
        %1099 = vmatpush1.msra.mxu0 0.0
        %1100 = vmatprep.mubr.f32.mxu0 0.0
        %1101 = vmatmul.mubr.f32.gmra.mrb[0].mxu0 %v1034
        %v1102 = vpop.f32.mrb[0].mxu0
        %v1103 = vadd.f32 0.0, %v1102
        %v1104 = vpop.f32.mrb[0].mxu0
        %1105 = vdwg.mxu0
        %1107 = vset.pattern.permute.xlu0 0
        %1108 = vperm.xlu0 %1107, %v1021
        %v1109 = vpop.permute.xlu0 %1108
        %v1111 = vadd.f32 %v1109, %v1103
        %s1112 = scalar_lea.vmem [#allocation9], 8
        %v1113 = vld [vmem:[%s1112] sm:$0xff]
        %1114 = vrot.lane.b32.xlu0 %v1022, 2
        %v1115 = vpop.permute.xlu0 %1114
        %1116 = vrot.lane.b32.xlu0 %v1020, 2
        %v1117 = vpop.permute.xlu0 %1116
        %v1118 = vsel %vm443, %v1115, %v1117
        %v1121 = vsel %vm446, %v1113, 0
        %1123 = vmatprep.subr.mxu0 0.0
        %1124 = vmatpush1.msra.mxu0 %v1118
        %1125 = vmatprep.subr.mxu0 0.0
        %1126 = vmatpush1.msra.mxu0 0.0
        %1127 = vmatprep.subr.mxu0 0.0
        %1128 = vmatpush1.msra.mxu0 0.0
        %1129 = vmatprep.subr.mxu0 0.0
        %1130 = vmatpush1.msra.mxu0 0.0
        %1131 = vmatprep.subr.mxu0 0.0
        %1132 = vmatpush1.msra.mxu0 0.0
        %1133 = vmatprep.subr.mxu0 0.0
        %1134 = vmatpush1.msra.mxu0 0.0
        %1135 = vmatprep.subr.mxu0 0.0
        %1136 = vmatpush1.msra.mxu0 0.0
        %1137 = vmatprep.subr.mxu0 0.0
        %1138 = vmatpush1.msra.mxu0 0.0
        %1139 = vmatprep.subr.mxu0 0.0
        %1140 = vmatpush1.msra.mxu0 0.0
        %1141 = vmatprep.subr.mxu0 0.0
        %1142 = vmatpush1.msra.mxu0 0.0
        %1143 = vmatprep.subr.mxu0 0.0
        %1144 = vmatpush1.msra.mxu0 0.0
        %1145 = vmatprep.subr.mxu0 0.0
        %1146 = vmatpush1.msra.mxu0 0.0
        %1147 = vmatprep.subr.mxu0 0.0
        %1148 = vmatpush1.msra.mxu0 0.0
        %1149 = vmatprep.subr.mxu0 0.0
        %1150 = vmatpush1.msra.mxu0 0.0
        %1151 = vmatprep.subr.mxu0 0.0
        %1152 = vmatpush1.msra.mxu0 0.0
        %1153 = vmatprep.subr.mxu0 0.0
        %1154 = vmatpush1.msra.mxu0 0.0
        %1155 = vmatprep.subr.mxu0 0.0
        %1156 = vmatpush1.msra.mxu0 0.0
        %1157 = vmatprep.subr.mxu0 0.0
        %1158 = vmatpush1.msra.mxu0 0.0
        %1159 = vmatprep.subr.mxu0 0.0
        %1160 = vmatpush1.msra.mxu0 0.0
        %1161 = vmatprep.subr.mxu0 0.0
        %1162 = vmatpush1.msra.mxu0 0.0
        %1163 = vmatprep.subr.mxu0 0.0
        %1164 = vmatpush1.msra.mxu0 0.0
        %1165 = vmatprep.subr.mxu0 0.0
        %1166 = vmatpush1.msra.mxu0 0.0
        %1167 = vmatprep.subr.mxu0 0.0
        %1168 = vmatpush1.msra.mxu0 0.0
        %1169 = vmatprep.subr.mxu0 0.0
        %1170 = vmatpush1.msra.mxu0 0.0
        %1171 = vmatprep.subr.mxu0 0.0
        %1172 = vmatpush1.msra.mxu0 0.0
        %1173 = vmatprep.subr.mxu0 0.0
        %1174 = vmatpush1.msra.mxu0 0.0
        %1175 = vmatprep.subr.mxu0 0.0
        %1176 = vmatpush1.msra.mxu0 0.0
        %1177 = vmatprep.subr.mxu0 0.0
        %1178 = vmatpush1.msra.mxu0 0.0
        %1179 = vmatprep.subr.mxu0 0.0
        %1180 = vmatpush1.msra.mxu0 0.0
        %1181 = vmatprep.subr.mxu0 0.0
        %1182 = vmatpush1.msra.mxu0 0.0
        %1183 = vmatprep.subr.mxu0 0.0
        %1184 = vmatpush1.msra.mxu0 0.0
        %1185 = vmatprep.subr.mxu0 0.0
        %1186 = vmatpush1.msra.mxu0 0.0
        %1187 = vmatprep.mubr.f32.mxu0 0.0
        %1188 = vmatmul.mubr.f32.gmra.mrb[0].mxu0 %v1121
        %v1189 = vpop.f32.mrb[0].mxu0
        %v1190 = vadd.f32 0.0, %v1189
        %v1191 = vpop.f32.mrb[0].mxu0
        %1192 = vdwg.mxu0
        %v1193 = vadd.f32 %v1111, %v1190
        %s1194 = scalar_lea.vmem [#allocation9], 16
        %v1195 = vld [vmem:[%s1194] sm:$0xff]
        %v1197 = vsel %vm446, %v1195, 0
        %1199 = vmatprep.subr.mxu0 0.0
        %1200 = vmatpush1.msra.mxu0 %v1020
        %1201 = vmatprep.subr.mxu0 0.0
        %1202 = vmatpush1.msra.mxu0 0.0
        %1203 = vmatprep.subr.mxu0 0.0
        %1204 = vmatpush1.msra.mxu0 0.0
        %1205 = vmatprep.subr.mxu0 0.0
        %1206 = vmatpush1.msra.mxu0 0.0
        %1207 = vmatprep.subr.mxu0 0.0
        %1208 = vmatpush1.msra.mxu0 0.0
        %1209 = vmatprep.subr.mxu0 0.0
        %1210 = vmatpush1.msra.mxu0 0.0
        %1211 = vmatprep.subr.mxu0 0.0
        %1212 = vmatpush1.msra.mxu0 0.0
        %1213 = vmatprep.subr.mxu0 0.0
        %1214 = vmatpush1.msra.mxu0 0.0
        %1215 = vmatprep.subr.mxu0 0.0
        %1216 = vmatpush1.msra.mxu0 0.0
        %1217 = vmatprep.subr.mxu0 0.0
        %1218 = vmatpush1.msra.mxu0 0.0
        %1219 = vmatprep.subr.mxu0 0.0
        %1220 = vmatpush1.msra.mxu0 0.0
        %1221 = vmatprep.subr.mxu0 0.0
        %1222 = vmatpush1.msra.mxu0 0.0
        %1223 = vmatprep.subr.mxu0 0.0
        %1224 = vmatpush1.msra.mxu0 0.0
        %1225 = vmatprep.subr.mxu0 0.0
        %1226 = vmatpush1.msra.mxu0 0.0
        %1227 = vmatprep.subr.mxu0 0.0
        %1228 = vmatpush1.msra.mxu0 0.0
        %1229 = vmatprep.subr.mxu0 0.0
        %1230 = vmatpush1.msra.mxu0 0.0
        %1231 = vmatprep.subr.mxu0 0.0
        %1232 = vmatpush1.msra.mxu0 0.0
        %1233 = vmatprep.subr.mxu0 0.0
        %1234 = vmatpush1.msra.mxu0 0.0
        %1235 = vmatprep.subr.mxu0 0.0
        %1236 = vmatpush1.msra.mxu0 0.0
        %1237 = vmatprep.subr.mxu0 0.0
        %1238 = vmatpush1.msra.mxu0 0.0
        %1239 = vmatprep.subr.mxu0 0.0
        %1240 = vmatpush1.msra.mxu0 0.0
        %1241 = vmatprep.subr.mxu0 0.0
        %1242 = vmatpush1.msra.mxu0 0.0
        %1243 = vmatprep.subr.mxu0 0.0
        %1244 = vmatpush1.msra.mxu0 0.0
        %1245 = vmatprep.subr.mxu0 0.0
        %1246 = vmatpush1.msra.mxu0 0.0
        %1247 = vmatprep.subr.mxu0 0.0
        %1248 = vmatpush1.msra.mxu0 0.0
        %1249 = vmatprep.subr.mxu0 0.0
        %1250 = vmatpush1.msra.mxu0 0.0
        %1251 = vmatprep.subr.mxu0 0.0
        %1252 = vmatpush1.msra.mxu0 0.0
        %1253 = vmatprep.subr.mxu0 0.0
        %1254 = vmatpush1.msra.mxu0 0.0
        %1255 = vmatprep.subr.mxu0 0.0
        %1256 = vmatpush1.msra.mxu0 0.0
        %1257 = vmatprep.subr.mxu0 0.0
        %1258 = vmatpush1.msra.mxu0 0.0
        %1259 = vmatprep.subr.mxu0 0.0
        %1260 = vmatpush1.msra.mxu0 0.0
        %1261 = vmatprep.subr.mxu0 0.0
        %1262 = vmatpush1.msra.mxu0 0.0
        %1263 = vmatprep.mubr.f32.mxu0 0.0
        %1264 = vmatmul.mubr.f32.gmra.mrb[0].mxu0 %v1197
        %v1265 = vpop.f32.mrb[0].mxu0
        %v1266 = vadd.f32 0.0, %v1265
        %v1267 = vpop.f32.mrb[0].mxu0
        %1268 = vdwg.mxu0
        %v1269 = vadd.f32 %v1193, %v1266
        %v1270 = vmax.f32 %v1269, 0.0
        %1271 = vst [vmem:[#allocation3 + $0x8] sm:$0xff] %v1270
        %v1272 = vld [vmem:[%s10] sm:$0xff]
        %v1273 = vld [vmem:[%s9] sm:$0xff]
        %v1274 = vld [vmem:[#allocation3] sm:$0xff]
        %v1275 = vld [vmem:[#allocation3 + $0x8] sm:$0xff]
        %1278 = vrot.lane.b32.xlu0 %v1274, 4
        %v1279 = vpop.permute.xlu0 %1278
        %1280 = vrot.lane.b32.xlu0 %v1275, 4
        %v1281 = vpop.permute.xlu0 %1280
        %v1282 = vsel %vm1030, %v1279, %v1281
        %v1285 = vsel %vm446, %v1273, 0
        %1287 = vmatprep.subr.mxu0 0.0
        %1288 = vmatpush1.msra.mxu0 %v1282
        %1289 = vmatprep.subr.mxu0 0.0
        %1290 = vmatpush1.msra.mxu0 0.0
        %1291 = vmatprep.subr.mxu0 0.0
        %1292 = vmatpush1.msra.mxu0 0.0
        %1293 = vmatprep.subr.mxu0 0.0
        %1294 = vmatpush1.msra.mxu0 0.0
        %1295 = vmatprep.subr.mxu0 0.0
        %1296 = vmatpush1.msra.mxu0 0.0
        %1297 = vmatprep.subr.mxu0 0.0
        %1298 = vmatpush1.msra.mxu0 0.0
        %1299 = vmatprep.subr.mxu0 0.0
        %1300 = vmatpush1.msra.mxu0 0.0
        %1301 = vmatprep.subr.mxu0 0.0
        %1302 = vmatpush1.msra.mxu0 0.0
        %1303 = vmatprep.subr.mxu0 0.0
        %1304 = vmatpush1.msra.mxu0 0.0
        %1305 = vmatprep.subr.mxu0 0.0
        %1306 = vmatpush1.msra.mxu0 0.0
        %1307 = vmatprep.subr.mxu0 0.0
        %1308 = vmatpush1.msra.mxu0 0.0
        %1309 = vmatprep.subr.mxu0 0.0
        %1310 = vmatpush1.msra.mxu0 0.0
        %1311 = vmatprep.subr.mxu0 0.0
        %1312 = vmatpush1.msra.mxu0 0.0
        %1313 = vmatprep.subr.mxu0 0.0
        %1314 = vmatpush1.msra.mxu0 0.0
        %1315 = vmatprep.subr.mxu0 0.0
        %1316 = vmatpush1.msra.mxu0 0.0
        %1317 = vmatprep.subr.mxu0 0.0
        %1318 = vmatpush1.msra.mxu0 0.0
        %1319 = vmatprep.subr.mxu0 0.0
        %1320 = vmatpush1.msra.mxu0 0.0
        %1321 = vmatprep.subr.mxu0 0.0
        %1322 = vmatpush1.msra.mxu0 0.0
        %1323 = vmatprep.subr.mxu0 0.0
        %1324 = vmatpush1.msra.mxu0 0.0
        %1325 = vmatprep.subr.mxu0 0.0
        %1326 = vmatpush1.msra.mxu0 0.0
        %1327 = vmatprep.subr.mxu0 0.0
        %1328 = vmatpush1.msra.mxu0 0.0
        %1329 = vmatprep.subr.mxu0 0.0
        %1330 = vmatpush1.msra.mxu0 0.0
        %1331 = vmatprep.subr.mxu0 0.0
        %1332 = vmatpush1.msra.mxu0 0.0
        %1333 = vmatprep.subr.mxu0 0.0
        %1334 = vmatpush1.msra.mxu0 0.0
        %1335 = vmatprep.subr.mxu0 0.0
        %1336 = vmatpush1.msra.mxu0 0.0
        %1337 = vmatprep.subr.mxu0 0.0
        %1338 = vmatpush1.msra.mxu0 0.0
        %1339 = vmatprep.subr.mxu0 0.0
        %1340 = vmatpush1.msra.mxu0 0.0
        %1341 = vmatprep.subr.mxu0 0.0
        %1342 = vmatpush1.msra.mxu0 0.0
        %1343 = vmatprep.subr.mxu0 0.0
        %1344 = vmatpush1.msra.mxu0 0.0
        %1345 = vmatprep.subr.mxu0 0.0
        %1346 = vmatpush1.msra.mxu0 0.0
        %1347 = vmatprep.subr.mxu0 0.0
        %1348 = vmatpush1.msra.mxu0 0.0
        %1349 = vmatprep.subr.mxu0 0.0
        %1350 = vmatpush1.msra.mxu0 0.0
        %1351 = vmatprep.mubr.f32.mxu0 0.0
        %1352 = vmatmul.mubr.f32.gmra.mrb[0].mxu0 %v1285
        %v1353 = vpop.f32.mrb[0].mxu0
        %v1354 = vadd.f32 0.0, %v1353
        %v1355 = vpop.f32.mrb[0].mxu0
        %1356 = vdwg.mxu0
        %1358 = vset.pattern.permute.xlu0 0
        %1359 = vperm.xlu0 %1358, %v1272
        %v1360 = vpop.permute.xlu0 %1359
        %v1362 = vadd.f32 %v1360, %v1354
        %s1363 = scalar_lea.vmem %s9, 8
        %v1364 = vld [vmem:[%s1363] sm:$0xff]
        %1365 = vrot.lane.b32.xlu0 %v1274, 2
        %v1366 = vpop.permute.xlu0 %1365
        %1367 = vrot.lane.b32.xlu0 %v1275, 2
        %v1368 = vpop.permute.xlu0 %1367
        %v1369 = vsel %vm443, %v1366, %v1368
        %v1372 = vsel %vm446, %v1364, 0
        %1374 = vmatprep.subr.mxu0 0.0
        %1375 = vmatpush1.msra.mxu0 %v1369
        %1376 = vmatprep.subr.mxu0 0.0
        %1377 = vmatpush1.msra.mxu0 0.0
        %1378 = vmatprep.subr.mxu0 0.0
        %1379 = vmatpush1.msra.mxu0 0.0
        %1380 = vmatprep.subr.mxu0 0.0
        %1381 = vmatpush1.msra.mxu0 0.0
        %1382 = vmatprep.subr.mxu0 0.0
        %1383 = vmatpush1.msra.mxu0 0.0
        %1384 = vmatprep.subr.mxu0 0.0
        %1385 = vmatpush1.msra.mxu0 0.0
        %1386 = vmatprep.subr.mxu0 0.0
        %1387 = vmatpush1.msra.mxu0 0.0
        %1388 = vmatprep.subr.mxu0 0.0
        %1389 = vmatpush1.msra.mxu0 0.0
        %1390 = vmatprep.subr.mxu0 0.0
        %1391 = vmatpush1.msra.mxu0 0.0
        %1392 = vmatprep.subr.mxu0 0.0
        %1393 = vmatpush1.msra.mxu0 0.0
        %1394 = vmatprep.subr.mxu0 0.0
        %1395 = vmatpush1.msra.mxu0 0.0
        %1396 = vmatprep.subr.mxu0 0.0
        %1397 = vmatpush1.msra.mxu0 0.0
        %1398 = vmatprep.subr.mxu0 0.0
        %1399 = vmatpush1.msra.mxu0 0.0
        %1400 = vmatprep.subr.mxu0 0.0
        %1401 = vmatpush1.msra.mxu0 0.0
        %1402 = vmatprep.subr.mxu0 0.0
        %1403 = vmatpush1.msra.mxu0 0.0
        %1404 = vmatprep.subr.mxu0 0.0
        %1405 = vmatpush1.msra.mxu0 0.0
        %1406 = vmatprep.subr.mxu0 0.0
        %1407 = vmatpush1.msra.mxu0 0.0
        %1408 = vmatprep.subr.mxu0 0.0
        %1409 = vmatpush1.msra.mxu0 0.0
        %1410 = vmatprep.subr.mxu0 0.0
        %1411 = vmatpush1.msra.mxu0 0.0
        %1412 = vmatprep.subr.mxu0 0.0
        %1413 = vmatpush1.msra.mxu0 0.0
        %1414 = vmatprep.subr.mxu0 0.0
        %1415 = vmatpush1.msra.mxu0 0.0
        %1416 = vmatprep.subr.mxu0 0.0
        %1417 = vmatpush1.msra.mxu0 0.0
        %1418 = vmatprep.subr.mxu0 0.0
        %1419 = vmatpush1.msra.mxu0 0.0
        %1420 = vmatprep.subr.mxu0 0.0
        %1421 = vmatpush1.msra.mxu0 0.0
        %1422 = vmatprep.subr.mxu0 0.0
        %1423 = vmatpush1.msra.mxu0 0.0
        %1424 = vmatprep.subr.mxu0 0.0
        %1425 = vmatpush1.msra.mxu0 0.0
        %1426 = vmatprep.subr.mxu0 0.0
        %1427 = vmatpush1.msra.mxu0 0.0
        %1428 = vmatprep.subr.mxu0 0.0
        %1429 = vmatpush1.msra.mxu0 0.0
        %1430 = vmatprep.subr.mxu0 0.0
        %1431 = vmatpush1.msra.mxu0 0.0
        %1432 = vmatprep.subr.mxu0 0.0
        %1433 = vmatpush1.msra.mxu0 0.0
        %1434 = vmatprep.subr.mxu0 0.0
        %1435 = vmatpush1.msra.mxu0 0.0
        %1436 = vmatprep.subr.mxu0 0.0
        %1437 = vmatpush1.msra.mxu0 0.0
        %1438 = vmatprep.mubr.f32.mxu0 0.0
        %1439 = vmatmul.mubr.f32.gmra.mrb[0].mxu0 %v1372
        %v1440 = vpop.f32.mrb[0].mxu0
        %v1441 = vadd.f32 0.0, %v1440
        %v1442 = vpop.f32.mrb[0].mxu0
        %1443 = vdwg.mxu0
        %v1444 = vadd.f32 %v1362, %v1441
        %s1445 = scalar_lea.vmem %s9, 16
        %v1446 = vld [vmem:[%s1445] sm:$0xff]
        %v1448 = vsel %vm446, %v1446, 0
        %1450 = vmatprep.subr.mxu0 0.0
        %1451 = vmatpush1.msra.mxu0 %v1275
        %1452 = vmatprep.subr.mxu0 0.0
        %1453 = vmatpush1.msra.mxu0 0.0
        %1454 = vmatprep.subr.mxu0 0.0
        %1455 = vmatpush1.msra.mxu0 0.0
        %1456 = vmatprep.subr.mxu0 0.0
        %1457 = vmatpush1.msra.mxu0 0.0
        %1458 = vmatprep.subr.mxu0 0.0
        %1459 = vmatpush1.msra.mxu0 0.0
        %1460 = vmatprep.subr.mxu0 0.0
        %1461 = vmatpush1.msra.mxu0 0.0
        %1462 = vmatprep.subr.mxu0 0.0
        %1463 = vmatpush1.msra.mxu0 0.0
        %1464 = vmatprep.subr.mxu0 0.0
        %1465 = vmatpush1.msra.mxu0 0.0
        %1466 = vmatprep.subr.mxu0 0.0
        %1467 = vmatpush1.msra.mxu0 0.0
        %1468 = vmatprep.subr.mxu0 0.0
        %1469 = vmatpush1.msra.mxu0 0.0
        %1470 = vmatprep.subr.mxu0 0.0
        %1471 = vmatpush1.msra.mxu0 0.0
        %1472 = vmatprep.subr.mxu0 0.0
        %1473 = vmatpush1.msra.mxu0 0.0
        %1474 = vmatprep.subr.mxu0 0.0
        %1475 = vmatpush1.msra.mxu0 0.0
        %1476 = vmatprep.subr.mxu0 0.0
        %1477 = vmatpush1.msra.mxu0 0.0
        %1478 = vmatprep.subr.mxu0 0.0
        %1479 = vmatpush1.msra.mxu0 0.0
        %1480 = vmatprep.subr.mxu0 0.0
        %1481 = vmatpush1.msra.mxu0 0.0
        %1482 = vmatprep.subr.mxu0 0.0
        %1483 = vmatpush1.msra.mxu0 0.0
        %1484 = vmatprep.subr.mxu0 0.0
        %1485 = vmatpush1.msra.mxu0 0.0
        %1486 = vmatprep.subr.mxu0 0.0
        %1487 = vmatpush1.msra.mxu0 0.0
        %1488 = vmatprep.subr.mxu0 0.0
        %1489 = vmatpush1.msra.mxu0 0.0
        %1490 = vmatprep.subr.mxu0 0.0
        %1491 = vmatpush1.msra.mxu0 0.0
        %1492 = vmatprep.subr.mxu0 0.0
        %1493 = vmatpush1.msra.mxu0 0.0
        %1494 = vmatprep.subr.mxu0 0.0
        %1495 = vmatpush1.msra.mxu0 0.0
        %1496 = vmatprep.subr.mxu0 0.0
        %1497 = vmatpush1.msra.mxu0 0.0
        %1498 = vmatprep.subr.mxu0 0.0
        %1499 = vmatpush1.msra.mxu0 0.0
        %1500 = vmatprep.subr.mxu0 0.0
        %1501 = vmatpush1.msra.mxu0 0.0
        %1502 = vmatprep.subr.mxu0 0.0
        %1503 = vmatpush1.msra.mxu0 0.0
        %1504 = vmatprep.subr.mxu0 0.0
        %1505 = vmatpush1.msra.mxu0 0.0
        %1506 = vmatprep.subr.mxu0 0.0
        %1507 = vmatpush1.msra.mxu0 0.0
        %1508 = vmatprep.subr.mxu0 0.0
        %1509 = vmatpush1.msra.mxu0 0.0
        %1510 = vmatprep.subr.mxu0 0.0
        %1511 = vmatpush1.msra.mxu0 0.0
        %1512 = vmatprep.subr.mxu0 0.0
        %1513 = vmatpush1.msra.mxu0 0.0
        %1514 = vmatprep.mubr.f32.mxu0 0.0
        %1515 = vmatmul.mubr.f32.gmra.mrb[0].mxu0 %v1448
        %v1516 = vpop.f32.mrb[0].mxu0
        %v1517 = vadd.f32 0.0, %v1516
        %v1518 = vpop.f32.mrb[0].mxu0
        %1519 = vdwg.mxu0
        %v1520 = vadd.f32 %v1444, %v1517
        %v1521 = vmax.f32 %v1520, 0.0
        %v1522 = vadd.f32 %v1521, %v1020
        %v1523 = vmax.f32 %v1522, 0.0
        %1524 = vst [vmem:[%s428] sm:$0xff] %v1523
        %s1525 = sand.u32 %s273, 1
        %s1526 = scalar_lea.sflag [#allocation6], %s1525
        %s1527 = sand.u32 %s273, 1
        %s1528 = smul.addr %s1527, 8
        %s1529 = scalar_lea.vmem [#allocation10], %s1528
        // Predicated region
        $region77: #{tpu_custom_call.1} parent=63 // pred_check
          %p1530 = pneg %p283
        $region78: #{tpu_custom_call.1} parent=63 // pred_check_branch
          %1532 = sbr.rel (%p1530) target = $region80
        $region79: #{tpu_custom_call.1} parent=63 // pred_region
          %s1534 = ssub.s32 128, 128
          %1535 = vsyncadd %s1526, %s1534
          %s1536 = smul.addr %s29, 128
          %s1537 = scalar_lea.hbm %s11, %s1536
          %s1539 = sshll.u32 %s1529, 4
          %s1540 = int_to_ptr.vmem [resolvable:$true] %s1539
          %1542 = dma.vmem_to_hbm [thread:$0]  %s1540, 128, %s1537, %s1526
        $region80: #{tpu_custom_call.1} parent=63 // pred_fallthru
          _
      $region64: #{tpu_custom_call.1} parent=5 // pred_fallthru
        _
      %p1543 = scmp.le.s32.totalorder 2, %s24
      // Predicated region
      $region81: #{tpu_custom_call.1} parent=5 // pred_check
        %p1544 = pneg %p1543
      $region82: #{tpu_custom_call.1} parent=5 // pred_check_branch
        %1546 = sbr.rel (%p1544) target = $region84
      $region83: #{tpu_custom_call.1} parent=5 // pred_region
        %s1547 = ssub.s32 %s24, 2
        // Predicated region
        $region85: #{tpu_custom_call.1} parent=83 // pred_check
          %p1548 = pneg %p289
        $region86: #{tpu_custom_call.1} parent=83 // pred_check_branch
          %1550 = sbr.rel (%p1548) target = $region88
        $region87: #{tpu_custom_call.1} parent=83 // pred_region
          %s1551 = sand.u32 %s274, 1
          %s1552 = scalar_lea.sflag [#allocation6], %s1551
          %s1553 = sand.u32 %s274, 1
          %s1554 = smul.addr %s1553, 8
          %s1555 = scalar_lea.vmem [#allocation10], %s1554
          %1556 = dma.done %s1552, 128
        $region88: #{tpu_custom_call.1} parent=83 // pred_fallthru
          _
      $region84: #{tpu_custom_call.1} parent=5 // pred_fallthru
        _
    $region6: #{tpu_custom_call.1} parent=1 // loop_footer
      %s28 = sadd.s32 1, %s24
    $region7: #{tpu_custom_call.1} parent=1 // loop_footer_branch
      %23 = sbr.rel target = $region3
    $region8: #{tpu_custom_call.1} parent=1 // loop_exit
      _
    %1557 = vsyncpa [#allocation5], 1
    %s1558 = scalar_lea.sflag [#allocation5], 1
    %1559 = vsyncpa %s1558, 1
    %1560 = vsyncpa [#allocation8], 1
    %1561 = vsyncpa [#allocation6], 1
    %s1562 = scalar_lea.sflag [#allocation6], 1
    %1563 = vsyncpa %s1562, 1

</llo_original>
